<compile_context>
chip_gen: v6e
topology: v6e:2x2x1
jax: 0.10.0
libtpu: 0.0.40
codegen_flags: <defaults>
</compile_context>

<pallas_src>
import jax
import jax.numpy as jnp
from jax import lax
from jax.experimental import pallas as pl
from jax.experimental.pallas import tpu as pltpu


def _round_up(n, m):
    return ((n + m - 1) // m) * m


def _make_kernel(T, Bp, Hp):
    def kernel(x_ref, wih_ref, whh_ref, b_ref,
               w1_ref, b1_ref, w2_ref, b2_ref,
               out_ref, xw_sc):
        # Hoisted input projection for ALL time steps in one MXU call:
        #   xw[t*Bp:(t+1)*Bp, :] = x_t @ W_ih^T + (b_ih + b_hh)
        xw_sc[...] = (jnp.dot(x_ref[...], wih_ref[...],
                              preferred_element_type=jnp.float32)
                      + b_ref[...])

        def step(t, carry):
            h, c = carry
            row = pl.multiple_of(t * Bp, Bp)              # sublane-aligned dynamic slice
            gates = xw_sc[pl.ds(row, Bp), :] + jnp.dot(
                h, whh_ref[...], preferred_element_type=jnp.float32)
            # Each gate occupies a whole 128-lane-aligned stripe of width Hp.
            i_g = jax.nn.sigmoid(gates[:, 0 * Hp:1 * Hp])
            f_g = jax.nn.sigmoid(gates[:, 1 * Hp:2 * Hp])
            g_g = jnp.tanh(gates[:, 2 * Hp:3 * Hp])
            o_g = jax.nn.sigmoid(gates[:, 3 * Hp:4 * Hp])
            c = f_g * c + i_g * g_g
            h = o_g * jnp.tanh(c)
            return h, c

        h0 = jnp.zeros((Bp, Hp), jnp.float32)
        c0 = jnp.zeros((Bp, Hp), jnp.float32)
        h, _ = lax.fori_loop(0, T, step, (h0, c0), unroll=True)

        # MLP head (dropout is identity at inference time).
        z1 = jnp.dot(h, w1_ref[...], preferred_element_type=jnp.float32) + b1_ref[...]
        z1 = jnp.maximum(z1, 0.0)
        # fc2 output width is 1: VPU multiply + lane reduce instead of an N=1 MXU pass.
        z2 = jnp.sum(z1 * w2_ref[...], axis=-1, keepdims=True) + b2_ref[...]
        out_ref[...] = jax.nn.sigmoid(z2)

    return kernel


def _pad_gate_cols(w, H, Hp):
    """Zero-pad each of the 4 gate blocks along the last axis from H to Hp lanes."""
    pads = [(0, 0)] * (w.ndim - 1) + [(0, Hp - H)]
    parts = [jnp.pad(w[..., k * H:(k + 1) * H], pads) for k in range(4)]
    return jnp.concatenate(parts, axis=-1)


def bicep_curl_classifier(x, params):
    """x: (B, T, D) float32, batch-first (PyTorch convention).  Returns (B, 1)."""
    B, T, D = x.shape
    H = params["w_hh_t"].shape[0]
    H2 = params["w1_t"].shape[1]

    Bp = _round_up(max(B, 8), 8)           # full sublane occupancy
    Hp = _round_up(H, 128)                 # 128-lane-aligned gate stripes
    H2p = _round_up(H2, 128)

    # ---- pad parameters into the lane-aligned kernel layout (zero padding is exact) ----
    w_ih_p = _pad_gate_cols(params["w_ih_t"], H, Hp)                        # (D, 4Hp)
    w_hh_p = jnp.pad(_pad_gate_cols(params["w_hh_t"], H, Hp),
                     ((0, Hp - H), (0, 0)))                                 # (Hp, 4Hp)
    b_p = _pad_gate_cols(params["b_gates"], H, Hp)                          # (1, 4Hp)
    w1_p = jnp.pad(params["w1_t"], ((0, Hp - H), (0, H2p - H2)))            # (Hp, H2p)
    b1_p = jnp.pad(params["b1"], ((0, 0), (0, H2p - H2)))                   # (1, H2p)
    w2_p = jnp.pad(params["w2_t"].T, ((0, 0), (0, H2p - H2)))               # (1, H2p)
    b2_p = params["b2"]                                                     # (1, 1)

    # ---- time-major, batch-padded, flattened input: (T*Bp, D) ----
    x_tm = jnp.transpose(x, (1, 0, 2))                                      # (T, B, D)
    x_tm = jnp.pad(x_tm, ((0, 0), (0, Bp - B), (0, 0)))                     # (T, Bp, D)
    x2d = x_tm.reshape(T * Bp, D)

    grid_spec = pltpu.PrefetchScalarGridSpec(
        num_scalar_prefetch=0,
        grid=(1,),                               # whole problem in one kernel invocation
        in_specs=[
            pl.BlockSpec((T * Bp, D), lambda i: (0, 0)),     # all time steps of x
            pl.BlockSpec((D, 4 * Hp), lambda i: (0, 0)),     # W_ih^T (gate-padded)
            pl.BlockSpec((Hp, 4 * Hp), lambda i: (0, 0)),    # W_hh^T (gate-padded)
            pl.BlockSpec((1, 4 * Hp), lambda i: (0, 0)),     # b_ih + b_hh
            pl.BlockSpec((Hp, H2p), lambda i: (0, 0)),       # fc1 W^T
            pl.BlockSpec((1, H2p), lambda i: (0, 0)),        # fc1 b
            pl.BlockSpec((1, H2p), lambda i: (0, 0)),        # fc2 W (as a row)
            pl.BlockSpec((1, 1), lambda i: (0, 0)),          # fc2 b
        ],
        out_specs=pl.BlockSpec((Bp, 1), lambda i: (0, 0)),
        scratch_shapes=[pltpu.VMEM((T * Bp, 4 * Hp), jnp.float32)],   # hoisted x @ W_ih
    )

    out_p = pl.pallas_call(
        _make_kernel(T, Bp, Hp),
        out_shape=jax.ShapeDtypeStruct((Bp, 1), jnp.float32),
        grid_spec=grid_spec,
        compiler_params=pltpu.CompilerParams(
            dimension_semantics=("arbitrary",)),
    )(x2d, w_ih_p, w_hh_p, b_p, w1_p, b1_p, w2_p, b2_p)

    return out_p[:B]


def init_params(key, input_dim, lstm_units):
    """Deterministic synthetic parameters (PyTorch-style uniform init), logical layout."""
    H, D, H2 = lstm_units, input_dim, lstm_units // 2
    ks = jax.random.split(key, 8)
    s = 1.0 / jnp.sqrt(H)

    w_ih = jax.random.uniform(ks[0], (4 * H, D), jnp.float32, -s, s)   # PyTorch (4H, D)
    w_hh = jax.random.uniform(ks[1], (4 * H, H), jnp.float32, -s, s)
    b_ih = jax.random.uniform(ks[2], (4 * H,), jnp.float32, -s, s)
    b_hh = jax.random.uniform(ks[3], (4 * H,), jnp.float32, -s, s)

    s1 = 1.0 / jnp.sqrt(H)
    w1 = jax.random.uniform(ks[4], (H2, H), jnp.float32, -s1, s1)
    b1 = jax.random.uniform(ks[5], (H2,), jnp.float32, -s1, s1)
    s2 = 1.0 / jnp.sqrt(H2)
    w2 = jax.random.uniform(ks[6], (1, H2), jnp.float32, -s2, s2)
    b2 = jax.random.uniform(ks[7], (1,), jnp.float32, -s2, s2)

    return {
        "w_ih_t": w_ih.T,                                     # (D, 4H)
        "w_hh_t": w_hh.T,                                     # (H, 4H)
        "b_gates": (b_ih + b_hh).reshape(1, 4 * H),
        "w1_t": w1.T,                                         # (H, H2)
        "b1": b1.reshape(1, H2),
        "w2_t": w2.T,                                         # (H2, 1)
        "b2": b2.reshape(1, 1),
    }


def _reference(x, p):
    """Pure-JAX reference of the PyTorch forward (eval mode)."""
    B, T, D = x.shape
    H = p["w_hh_t"].shape[0]
    h = jnp.zeros((B, H), jnp.float32)
    c = jnp.zeros((B, H), jnp.float32)
    for t in range(T):
        g = x[:, t, :] @ p["w_ih_t"] + h @ p["w_hh_t"] + p["b_gates"]
        i = jax.nn.sigmoid(g[:, 0 * H:1 * H])
        f = jax.nn.sigmoid(g[:, 1 * H:2 * H])
        gg = jnp.tanh(g[:, 2 * H:3 * H])
        o = jax.nn.sigmoid(g[:, 3 * H:4 * H])
        c = f * c + i * gg
        h = o * jnp.tanh(c)
    z = jnp.maximum(h @ p["w1_t"] + p["b1"], 0.0)
    z = z @ p["w2_t"] + p["b2"]
    return jax.nn.sigmoid(z)


if __name__ == "__main__":
    B, T, D, H = 2, 8, 32, 64                                 # batch, seq, input_dim, lstm_units
    key = jax.random.PRNGKey(0)
    kx, kp = jax.random.split(key)
    x = jax.random.normal(kx, (B, T, D), jnp.float32)
    params = init_params(kp, D, H)

    out = bicep_curl_classifier(x, params)
    out = jax.block_until_ready(out)

    ref = _reference(x, params)
    assert out.shape == (B, 1)
    assert jnp.allclose(out, ref, atol=1e-3, rtol=1e-3), (out, ref)
    print("KERNEL_OK")
</pallas_src>

<mosaic_0001>
module attributes {stable_mosaic.version = 11 : i64} {
  func.func @kernel(%arg0: i32, %arg1: memref<64x32xf32, #tpu.memory_space<vmem>>, %arg2: memref<32x512xf32, #tpu.memory_space<vmem>>, %arg3: memref<128x512xf32, #tpu.memory_space<vmem>>, %arg4: memref<1x512xf32, #tpu.memory_space<vmem>>, %arg5: memref<128x128xf32, #tpu.memory_space<vmem>>, %arg6: memref<1x128xf32, #tpu.memory_space<vmem>>, %arg7: memref<1x128xf32, #tpu.memory_space<vmem>>, %arg8: memref<1x1xf32, #tpu.memory_space<vmem>>, %arg9: memref<8x1xf32, #tpu.memory_space<vmem>>, %arg10: memref<64x512xf32, #tpu.memory_space<vmem>>) attributes {dimension_semantics = [#tpu.dimension_semantics<arbitrary>], iteration_bounds = array<i64: 1>, scalar_prefetch = 0 : i64, scratch_operands = 1 : i64, tpu.core_type = #tpu.core_type<tc>, window_params = [{pipeline_mode = #tpu.pipeline_mode<synchronous>, transform_indices = @transform_0, window_bounds = array<i64: 64, 32>}, {pipeline_mode = #tpu.pipeline_mode<synchronous>, transform_indices = @transform_1, window_bounds = array<i64: 32, 512>}, {pipeline_mode = #tpu.pipeline_mode<synchronous>, transform_indices = @transform_2, window_bounds = array<i64: 128, 512>}, {pipeline_mode = #tpu.pipeline_mode<synchronous>, transform_indices = @transform_3, window_bounds = array<i64: 1, 512>}, {pipeline_mode = #tpu.pipeline_mode<synchronous>, transform_indices = @transform_4, window_bounds = array<i64: 128, 128>}, {pipeline_mode = #tpu.pipeline_mode<synchronous>, transform_indices = @transform_5, window_bounds = array<i64: 1, 128>}, {pipeline_mode = #tpu.pipeline_mode<synchronous>, transform_indices = @transform_6, window_bounds = array<i64: 1, 128>}, {pipeline_mode = #tpu.pipeline_mode<synchronous>, transform_indices = @transform_7, window_bounds = array<i64: 1, 1>}, {pipeline_mode = #tpu.pipeline_mode<synchronous>, transform_indices = @transform_8, window_bounds = array<i64: 8, 1>}]} {
    %c0 = arith.constant 0 : index
    %c0_0 = arith.constant 0 : index
    %0 = vector.load %arg1[%c0, %c0_0] : memref<64x32xf32, #tpu.memory_space<vmem>>, vector<64x32xf32>
    %c0_1 = arith.constant 0 : index
    %c0_2 = arith.constant 0 : index
    %1 = vector.load %arg2[%c0_1, %c0_2] : memref<32x512xf32, #tpu.memory_space<vmem>>, vector<32x512xf32>
    %cst = arith.constant dense<0.000000e+00> : vector<64x512xf32>
    %2 = tpu.matmul %0, %1, %cst {dimension_numbers = #tpu.dot_dimension_numbers<[1], [0], [0], [1], [0, 0, 1, 1], [], []>} : vector<64x32xf32>, vector<32x512xf32>, vector<64x512xf32> -> vector<64x512xf32>
    %c0_3 = arith.constant 0 : index
    %c0_4 = arith.constant 0 : index
    %3 = vector.load %arg4[%c0_3, %c0_4] : memref<1x512xf32, #tpu.memory_space<vmem>>, vector<1x512xf32>
    %4 = vector.broadcast %3 : vector<1x512xf32> to vector<64x512xf32>
    %5 = arith.addf %2, %4 : vector<64x512xf32>
    %c0_5 = arith.constant 0 : index
    %c0_6 = arith.constant 0 : index
    %6 = vector.load %arg10[%c0_5, %c0_6] : memref<64x512xf32, #tpu.memory_space<vmem>>, vector<64x512xf32>
    tpu.vector_store %arg10[%c0_5, %c0_6], %5 {strides = array<i32>} : memref<64x512xf32, #tpu.memory_space<vmem>>, vector<64x512xf32>,
    %cst_7 = arith.constant 0.000000e+00 : f32
    %7 = vector.broadcast %cst_7 : f32 to vector<8x128xf32>
    %cst_8 = arith.constant 0.000000e+00 : f32
    %8 = vector.broadcast %cst_8 : f32 to vector<8x128xf32>
    %c0_i32 = arith.constant 0 : i32
    %c8_i32 = arith.constant 8 : i32
    %9 = arith.muli %c0_i32, %c8_i32 : i32
    %10 = tpu.assume_multiple %9, 8 : i32
    %11 = arith.index_cast %10 : i32 to index
    %c0_9 = arith.constant 0 : index
    %12 = vector.load %arg10[%11, %c0_9] : memref<64x512xf32, #tpu.memory_space<vmem>>, vector<8x512xf32>
    %c0_10 = arith.constant 0 : index
    %c0_11 = arith.constant 0 : index
    %13 = vector.load %arg3[%c0_10, %c0_11] : memref<128x512xf32, #tpu.memory_space<vmem>>, vector<128x512xf32>
    %cst_12 = arith.constant dense<0.000000e+00> : vector<8x512xf32>
    %14 = tpu.matmul %7, %13, %cst_12 {dimension_numbers = #tpu.dot_dimension_numbers<[1], [0], [0], [1], [0, 0, 1, 1], [], []>} : vector<8x128xf32>, vector<128x512xf32>, vector<8x512xf32> -> vector<8x512xf32>
    %15 = arith.addf %12, %14 : vector<8x512xf32>
    %16 = vector.extract_strided_slice %15 {offsets = [0, 0], sizes = [8, 128], strides = [1, 1]} : vector<8x512xf32> to vector<8x128xf32>
    %17 = arith.negf %16 : vector<8x128xf32>
    %18 = math.exp %17 : vector<8x128xf32>
    %cst_13 = arith.constant 1.000000e+00 : f32
    %19 = vector.broadcast %cst_13 : f32 to vector<8x128xf32>
    %20 = arith.addf %19, %18 : vector<8x128xf32>
    %21 = arith.divf %19, %20 : vector<8x128xf32>
    %22 = vector.extract_strided_slice %15 {offsets = [0, 128], sizes = [8, 128], strides = [1, 1]} : vector<8x512xf32> to vector<8x128xf32>
    %23 = arith.negf %22 : vector<8x128xf32>
    %24 = math.exp %23 : vector<8x128xf32>
    %cst_14 = arith.constant 1.000000e+00 : f32
    %25 = vector.broadcast %cst_14 : f32 to vector<8x128xf32>
    %26 = arith.addf %25, %24 : vector<8x128xf32>
    %27 = arith.divf %25, %26 : vector<8x128xf32>
    %28 = vector.extract_strided_slice %15 {offsets = [0, 256], sizes = [8, 128], strides = [1, 1]} : vector<8x512xf32> to vector<8x128xf32>
    %29 = math.tanh %28 : vector<8x128xf32>
    %30 = vector.extract_strided_slice %15 {offsets = [0, 384], sizes = [8, 128], strides = [1, 1]} : vector<8x512xf32> to vector<8x128xf32>
    %31 = arith.negf %30 : vector<8x128xf32>
    %32 = math.exp %31 : vector<8x128xf32>
    %cst_15 = arith.constant 1.000000e+00 : f32
    %33 = vector.broadcast %cst_15 : f32 to vector<8x128xf32>
    %34 = arith.addf %33, %32 : vector<8x128xf32>
    %35 = arith.divf %33, %34 : vector<8x128xf32>
    %36 = arith.mulf %27, %8 : vector<8x128xf32>
    %37 = arith.mulf %21, %29 : vector<8x128xf32>
    %38 = arith.addf %36, %37 : vector<8x128xf32>
    %39 = math.tanh %38 : vector<8x128xf32>
    %40 = arith.mulf %35, %39 : vector<8x128xf32>
    %c1_i32 = arith.constant 1 : i32
    %c8_i32_16 = arith.constant 8 : i32
    %41 = arith.muli %c1_i32, %c8_i32_16 : i32
    %42 = tpu.assume_multiple %41, 8 : i32
    %43 = arith.index_cast %42 : i32 to index
    %c0_17 = arith.constant 0 : index
    %44 = vector.load %arg10[%43, %c0_17] : memref<64x512xf32, #tpu.memory_space<vmem>>, vector<8x512xf32>
    %c0_18 = arith.constant 0 : index
    %c0_19 = arith.constant 0 : index
    %45 = vector.load %arg3[%c0_18, %c0_19] : memref<128x512xf32, #tpu.memory_space<vmem>>, vector<128x512xf32>
    %cst_20 = arith.constant dense<0.000000e+00> : vector<8x512xf32>
    %46 = tpu.matmul %40, %45, %cst_20 {dimension_numbers = #tpu.dot_dimension_numbers<[1], [0], [0], [1], [0, 0, 1, 1], [], []>} : vector<8x128xf32>, vector<128x512xf32>, vector<8x512xf32> -> vector<8x512xf32>
    %47 = arith.addf %44, %46 : vector<8x512xf32>
    %48 = vector.extract_strided_slice %47 {offsets = [0, 0], sizes = [8, 128], strides = [1, 1]} : vector<8x512xf32> to vector<8x128xf32>
    %49 = arith.negf %48 : vector<8x128xf32>
    %50 = math.exp %49 : vector<8x128xf32>
    %cst_21 = arith.constant 1.000000e+00 : f32
    %51 = vector.broadcast %cst_21 : f32 to vector<8x128xf32>
    %52 = arith.addf %51, %50 : vector<8x128xf32>
    %53 = arith.divf %51, %52 : vector<8x128xf32>
    %54 = vector.extract_strided_slice %47 {offsets = [0, 128], sizes = [8, 128], strides = [1, 1]} : vector<8x512xf32> to vector<8x128xf32>
    %55 = arith.negf %54 : vector<8x128xf32>
    %56 = math.exp %55 : vector<8x128xf32>
    %cst_22 = arith.constant 1.000000e+00 : f32
    %57 = vector.broadcast %cst_22 : f32 to vector<8x128xf32>
    %58 = arith.addf %57, %56 : vector<8x128xf32>
    %59 = arith.divf %57, %58 : vector<8x128xf32>
    %60 = vector.extract_strided_slice %47 {offsets = [0, 256], sizes = [8, 128], strides = [1, 1]} : vector<8x512xf32> to vector<8x128xf32>
    %61 = math.tanh %60 : vector<8x128xf32>
    %62 = vector.extract_strided_slice %47 {offsets = [0, 384], sizes = [8, 128], strides = [1, 1]} : vector<8x512xf32> to vector<8x128xf32>
    %63 = arith.negf %62 : vector<8x128xf32>
    %64 = math.exp %63 : vector<8x128xf32>
    %cst_23 = arith.constant 1.000000e+00 : f32
    %65 = vector.broadcast %cst_23 : f32 to vector<8x128xf32>
    %66 = arith.addf %65, %64 : vector<8x128xf32>
    %67 = arith.divf %65, %66 : vector<8x128xf32>
    %68 = arith.mulf %59, %38 : vector<8x128xf32>
    %69 = arith.mulf %53, %61 : vector<8x128xf32>
    %70 = arith.addf %68, %69 : vector<8x128xf32>
    %71 = math.tanh %70 : vector<8x128xf32>
    %72 = arith.mulf %67, %71 : vector<8x128xf32>
    %c2_i32 = arith.constant 2 : i32
    %c8_i32_24 = arith.constant 8 : i32
    %73 = arith.muli %c2_i32, %c8_i32_24 : i32
    %74 = tpu.assume_multiple %73, 8 : i32
    %75 = arith.index_cast %74 : i32 to index
    %c0_25 = arith.constant 0 : index
    %76 = vector.load %arg10[%75, %c0_25] : memref<64x512xf32, #tpu.memory_space<vmem>>, vector<8x512xf32>
    %c0_26 = arith.constant 0 : index
    %c0_27 = arith.constant 0 : index
    %77 = vector.load %arg3[%c0_26, %c0_27] : memref<128x512xf32, #tpu.memory_space<vmem>>, vector<128x512xf32>
    %cst_28 = arith.constant dense<0.000000e+00> : vector<8x512xf32>
    %78 = tpu.matmul %72, %77, %cst_28 {dimension_numbers = #tpu.dot_dimension_numbers<[1], [0], [0], [1], [0, 0, 1, 1], [], []>} : vector<8x128xf32>, vector<128x512xf32>, vector<8x512xf32> -> vector<8x512xf32>
    %79 = arith.addf %76, %78 : vector<8x512xf32>
    %80 = vector.extract_strided_slice %79 {offsets = [0, 0], sizes = [8, 128], strides = [1, 1]} : vector<8x512xf32> to vector<8x128xf32>
    %81 = arith.negf %80 : vector<8x128xf32>
    %82 = math.exp %81 : vector<8x128xf32>
    %cst_29 = arith.constant 1.000000e+00 : f32
    %83 = vector.broadcast %cst_29 : f32 to vector<8x128xf32>
    %84 = arith.addf %83, %82 : vector<8x128xf32>
    %85 = arith.divf %83, %84 : vector<8x128xf32>
    %86 = vector.extract_strided_slice %79 {offsets = [0, 128], sizes = [8, 128], strides = [1, 1]} : vector<8x512xf32> to vector<8x128xf32>
    %87 = arith.negf %86 : vector<8x128xf32>
    %88 = math.exp %87 : vector<8x128xf32>
    %cst_30 = arith.constant 1.000000e+00 : f32
    %89 = vector.broadcast %cst_30 : f32 to vector<8x128xf32>
    %90 = arith.addf %89, %88 : vector<8x128xf32>
    %91 = arith.divf %89, %90 : vector<8x128xf32>
    %92 = vector.extract_strided_slice %79 {offsets = [0, 256], sizes = [8, 128], strides = [1, 1]} : vector<8x512xf32> to vector<8x128xf32>
    %93 = math.tanh %92 : vector<8x128xf32>
    %94 = vector.extract_strided_slice %79 {offsets = [0, 384], sizes = [8, 128], strides = [1, 1]} : vector<8x512xf32> to vector<8x128xf32>
    %95 = arith.negf %94 : vector<8x128xf32>
    %96 = math.exp %95 : vector<8x128xf32>
    %cst_31 = arith.constant 1.000000e+00 : f32
    %97 = vector.broadcast %cst_31 : f32 to vector<8x128xf32>
    %98 = arith.addf %97, %96 : vector<8x128xf32>
    %99 = arith.divf %97, %98 : vector<8x128xf32>
    %100 = arith.mulf %91, %70 : vector<8x128xf32>
    %101 = arith.mulf %85, %93 : vector<8x128xf32>
    %102 = arith.addf %100, %101 : vector<8x128xf32>
    %103 = math.tanh %102 : vector<8x128xf32>
    %104 = arith.mulf %99, %103 : vector<8x128xf32>
    %c3_i32 = arith.constant 3 : i32
    %c8_i32_32 = arith.constant 8 : i32
    %105 = arith.muli %c3_i32, %c8_i32_32 : i32
    %106 = tpu.assume_multiple %105, 8 : i32
    %107 = arith.index_cast %106 : i32 to index
    %c0_33 = arith.constant 0 : index
    %108 = vector.load %arg10[%107, %c0_33] : memref<64x512xf32, #tpu.memory_space<vmem>>, vector<8x512xf32>
    %c0_34 = arith.constant 0 : index
    %c0_35 = arith.constant 0 : index
    %109 = vector.load %arg3[%c0_34, %c0_35] : memref<128x512xf32, #tpu.memory_space<vmem>>, vector<128x512xf32>
    %cst_36 = arith.constant dense<0.000000e+00> : vector<8x512xf32>
    %110 = tpu.matmul %104, %109, %cst_36 {dimension_numbers = #tpu.dot_dimension_numbers<[1], [0], [0], [1], [0, 0, 1, 1], [], []>} : vector<8x128xf32>, vector<128x512xf32>, vector<8x512xf32> -> vector<8x512xf32>
    %111 = arith.addf %108, %110 : vector<8x512xf32>
    %112 = vector.extract_strided_slice %111 {offsets = [0, 0], sizes = [8, 128], strides = [1, 1]} : vector<8x512xf32> to vector<8x128xf32>
    %113 = arith.negf %112 : vector<8x128xf32>
    %114 = math.exp %113 : vector<8x128xf32>
    %cst_37 = arith.constant 1.000000e+00 : f32
    %115 = vector.broadcast %cst_37 : f32 to vector<8x128xf32>
    %116 = arith.addf %115, %114 : vector<8x128xf32>
    %117 = arith.divf %115, %116 : vector<8x128xf32>
    %118 = vector.extract_strided_slice %111 {offsets = [0, 128], sizes = [8, 128], strides = [1, 1]} : vector<8x512xf32> to vector<8x128xf32>
    %119 = arith.negf %118 : vector<8x128xf32>
    %120 = math.exp %119 : vector<8x128xf32>
    %cst_38 = arith.constant 1.000000e+00 : f32
    %121 = vector.broadcast %cst_38 : f32 to vector<8x128xf32>
    %122 = arith.addf %121, %120 : vector<8x128xf32>
    %123 = arith.divf %121, %122 : vector<8x128xf32>
    %124 = vector.extract_strided_slice %111 {offsets = [0, 256], sizes = [8, 128], strides = [1, 1]} : vector<8x512xf32> to vector<8x128xf32>
    %125 = math.tanh %124 : vector<8x128xf32>
    %126 = vector.extract_strided_slice %111 {offsets = [0, 384], sizes = [8, 128], strides = [1, 1]} : vector<8x512xf32> to vector<8x128xf32>
    %127 = arith.negf %126 : vector<8x128xf32>
    %128 = math.exp %127 : vector<8x128xf32>
    %cst_39 = arith.constant 1.000000e+00 : f32
    %129 = vector.broadcast %cst_39 : f32 to vector<8x128xf32>
    %130 = arith.addf %129, %128 : vector<8x128xf32>
    %131 = arith.divf %129, %130 : vector<8x128xf32>
    %132 = arith.mulf %123, %102 : vector<8x128xf32>
    %133 = arith.mulf %117, %125 : vector<8x128xf32>
    %134 = arith.addf %132, %133 : vector<8x128xf32>
    %135 = math.tanh %134 : vector<8x128xf32>
    %136 = arith.mulf %131, %135 : vector<8x128xf32>
    %c4_i32 = arith.constant 4 : i32
    %c8_i32_40 = arith.constant 8 : i32
    %137 = arith.muli %c4_i32, %c8_i32_40 : i32
    %138 = tpu.assume_multiple %137, 8 : i32
    %139 = arith.index_cast %138 : i32 to index
    %c0_41 = arith.constant 0 : index
    %140 = vector.load %arg10[%139, %c0_41] : memref<64x512xf32, #tpu.memory_space<vmem>>, vector<8x512xf32>
    %c0_42 = arith.constant 0 : index
    %c0_43 = arith.constant 0 : index
    %141 = vector.load %arg3[%c0_42, %c0_43] : memref<128x512xf32, #tpu.memory_space<vmem>>, vector<128x512xf32>
    %cst_44 = arith.constant dense<0.000000e+00> : vector<8x512xf32>
    %142 = tpu.matmul %136, %141, %cst_44 {dimension_numbers = #tpu.dot_dimension_numbers<[1], [0], [0], [1], [0, 0, 1, 1], [], []>} : vector<8x128xf32>, vector<128x512xf32>, vector<8x512xf32> -> vector<8x512xf32>
    %143 = arith.addf %140, %142 : vector<8x512xf32>
    %144 = vector.extract_strided_slice %143 {offsets = [0, 0], sizes = [8, 128], strides = [1, 1]} : vector<8x512xf32> to vector<8x128xf32>
    %145 = arith.negf %144 : vector<8x128xf32>
    %146 = math.exp %145 : vector<8x128xf32>
    %cst_45 = arith.constant 1.000000e+00 : f32
    %147 = vector.broadcast %cst_45 : f32 to vector<8x128xf32>
    %148 = arith.addf %147, %146 : vector<8x128xf32>
    %149 = arith.divf %147, %148 : vector<8x128xf32>
    %150 = vector.extract_strided_slice %143 {offsets = [0, 128], sizes = [8, 128], strides = [1, 1]} : vector<8x512xf32> to vector<8x128xf32>
    %151 = arith.negf %150 : vector<8x128xf32>
    %152 = math.exp %151 : vector<8x128xf32>
    %cst_46 = arith.constant 1.000000e+00 : f32
    %153 = vector.broadcast %cst_46 : f32 to vector<8x128xf32>
    %154 = arith.addf %153, %152 : vector<8x128xf32>
    %155 = arith.divf %153, %154 : vector<8x128xf32>
    %156 = vector.extract_strided_slice %143 {offsets = [0, 256], sizes = [8, 128], strides = [1, 1]} : vector<8x512xf32> to vector<8x128xf32>
    %157 = math.tanh %156 : vector<8x128xf32>
    %158 = vector.extract_strided_slice %143 {offsets = [0, 384], sizes = [8, 128], strides = [1, 1]} : vector<8x512xf32> to vector<8x128xf32>
    %159 = arith.negf %158 : vector<8x128xf32>
    %160 = math.exp %159 : vector<8x128xf32>
    %cst_47 = arith.constant 1.000000e+00 : f32
    %161 = vector.broadcast %cst_47 : f32 to vector<8x128xf32>
    %162 = arith.addf %161, %160 : vector<8x128xf32>
    %163 = arith.divf %161, %162 : vector<8x128xf32>
    %164 = arith.mulf %155, %134 : vector<8x128xf32>
    %165 = arith.mulf %149, %157 : vector<8x128xf32>
    %166 = arith.addf %164, %165 : vector<8x128xf32>
    %167 = math.tanh %166 : vector<8x128xf32>
    %168 = arith.mulf %163, %167 : vector<8x128xf32>
    %c5_i32 = arith.constant 5 : i32
    %c8_i32_48 = arith.constant 8 : i32
    %169 = arith.muli %c5_i32, %c8_i32_48 : i32
    %170 = tpu.assume_multiple %169, 8 : i32
    %171 = arith.index_cast %170 : i32 to index
    %c0_49 = arith.constant 0 : index
    %172 = vector.load %arg10[%171, %c0_49] : memref<64x512xf32, #tpu.memory_space<vmem>>, vector<8x512xf32>
    %c0_50 = arith.constant 0 : index
    %c0_51 = arith.constant 0 : index
    %173 = vector.load %arg3[%c0_50, %c0_51] : memref<128x512xf32, #tpu.memory_space<vmem>>, vector<128x512xf32>
    %cst_52 = arith.constant dense<0.000000e+00> : vector<8x512xf32>
    %174 = tpu.matmul %168, %173, %cst_52 {dimension_numbers = #tpu.dot_dimension_numbers<[1], [0], [0], [1], [0, 0, 1, 1], [], []>} : vector<8x128xf32>, vector<128x512xf32>, vector<8x512xf32> -> vector<8x512xf32>
    %175 = arith.addf %172, %174 : vector<8x512xf32>
    %176 = vector.extract_strided_slice %175 {offsets = [0, 0], sizes = [8, 128], strides = [1, 1]} : vector<8x512xf32> to vector<8x128xf32>
    %177 = arith.negf %176 : vector<8x128xf32>
    %178 = math.exp %177 : vector<8x128xf32>
    %cst_53 = arith.constant 1.000000e+00 : f32
    %179 = vector.broadcast %cst_53 : f32 to vector<8x128xf32>
    %180 = arith.addf %179, %178 : vector<8x128xf32>
    %181 = arith.divf %179, %180 : vector<8x128xf32>
    %182 = vector.extract_strided_slice %175 {offsets = [0, 128], sizes = [8, 128], strides = [1, 1]} : vector<8x512xf32> to vector<8x128xf32>
    %183 = arith.negf %182 : vector<8x128xf32>
    %184 = math.exp %183 : vector<8x128xf32>
    %cst_54 = arith.constant 1.000000e+00 : f32
    %185 = vector.broadcast %cst_54 : f32 to vector<8x128xf32>
    %186 = arith.addf %185, %184 : vector<8x128xf32>
    %187 = arith.divf %185, %186 : vector<8x128xf32>
    %188 = vector.extract_strided_slice %175 {offsets = [0, 256], sizes = [8, 128], strides = [1, 1]} : vector<8x512xf32> to vector<8x128xf32>
    %189 = math.tanh %188 : vector<8x128xf32>
    %190 = vector.extract_strided_slice %175 {offsets = [0, 384], sizes = [8, 128], strides = [1, 1]} : vector<8x512xf32> to vector<8x128xf32>
    %191 = arith.negf %190 : vector<8x128xf32>
    %192 = math.exp %191 : vector<8x128xf32>
    %cst_55 = arith.constant 1.000000e+00 : f32
    %193 = vector.broadcast %cst_55 : f32 to vector<8x128xf32>
    %194 = arith.addf %193, %192 : vector<8x128xf32>
    %195 = arith.divf %193, %194 : vector<8x128xf32>
    %196 = arith.mulf %187, %166 : vector<8x128xf32>
    %197 = arith.mulf %181, %189 : vector<8x128xf32>
    %198 = arith.addf %196, %197 : vector<8x128xf32>
    %199 = math.tanh %198 : vector<8x128xf32>
    %200 = arith.mulf %195, %199 : vector<8x128xf32>
    %c6_i32 = arith.constant 6 : i32
    %c8_i32_56 = arith.constant 8 : i32
    %201 = arith.muli %c6_i32, %c8_i32_56 : i32
    %202 = tpu.assume_multiple %201, 8 : i32
    %203 = arith.index_cast %202 : i32 to index
    %c0_57 = arith.constant 0 : index
    %204 = vector.load %arg10[%203, %c0_57] : memref<64x512xf32, #tpu.memory_space<vmem>>, vector<8x512xf32>
    %c0_58 = arith.constant 0 : index
    %c0_59 = arith.constant 0 : index
    %205 = vector.load %arg3[%c0_58, %c0_59] : memref<128x512xf32, #tpu.memory_space<vmem>>, vector<128x512xf32>
    %cst_60 = arith.constant dense<0.000000e+00> : vector<8x512xf32>
    %206 = tpu.matmul %200, %205, %cst_60 {dimension_numbers = #tpu.dot_dimension_numbers<[1], [0], [0], [1], [0, 0, 1, 1], [], []>} : vector<8x128xf32>, vector<128x512xf32>, vector<8x512xf32> -> vector<8x512xf32>
    %207 = arith.addf %204, %206 : vector<8x512xf32>
    %208 = vector.extract_strided_slice %207 {offsets = [0, 0], sizes = [8, 128], strides = [1, 1]} : vector<8x512xf32> to vector<8x128xf32>
    %209 = arith.negf %208 : vector<8x128xf32>
    %210 = math.exp %209 : vector<8x128xf32>
    %cst_61 = arith.constant 1.000000e+00 : f32
    %211 = vector.broadcast %cst_61 : f32 to vector<8x128xf32>
    %212 = arith.addf %211, %210 : vector<8x128xf32>
    %213 = arith.divf %211, %212 : vector<8x128xf32>
    %214 = vector.extract_strided_slice %207 {offsets = [0, 128], sizes = [8, 128], strides = [1, 1]} : vector<8x512xf32> to vector<8x128xf32>
    %215 = arith.negf %214 : vector<8x128xf32>
    %216 = math.exp %215 : vector<8x128xf32>
    %cst_62 = arith.constant 1.000000e+00 : f32
    %217 = vector.broadcast %cst_62 : f32 to vector<8x128xf32>
    %218 = arith.addf %217, %216 : vector<8x128xf32>
    %219 = arith.divf %217, %218 : vector<8x128xf32>
    %220 = vector.extract_strided_slice %207 {offsets = [0, 256], sizes = [8, 128], strides = [1, 1]} : vector<8x512xf32> to vector<8x128xf32>
    %221 = math.tanh %220 : vector<8x128xf32>
    %222 = vector.extract_strided_slice %207 {offsets = [0, 384], sizes = [8, 128], strides = [1, 1]} : vector<8x512xf32> to vector<8x128xf32>
    %223 = arith.negf %222 : vector<8x128xf32>
    %224 = math.exp %223 : vector<8x128xf32>
    %cst_63 = arith.constant 1.000000e+00 : f32
    %225 = vector.broadcast %cst_63 : f32 to vector<8x128xf32>
    %226 = arith.addf %225, %224 : vector<8x128xf32>
    %227 = arith.divf %225, %226 : vector<8x128xf32>
    %228 = arith.mulf %219, %198 : vector<8x128xf32>
    %229 = arith.mulf %213, %221 : vector<8x128xf32>
    %230 = arith.addf %228, %229 : vector<8x128xf32>
    %231 = math.tanh %230 : vector<8x128xf32>
    %232 = arith.mulf %227, %231 : vector<8x128xf32>
    %c7_i32 = arith.constant 7 : i32
    %c8_i32_64 = arith.constant 8 : i32
    %233 = arith.muli %c7_i32, %c8_i32_64 : i32
    %234 = tpu.assume_multiple %233, 8 : i32
    %235 = arith.index_cast %234 : i32 to index
    %c0_65 = arith.constant 0 : index
    %236 = vector.load %arg10[%235, %c0_65] : memref<64x512xf32, #tpu.memory_space<vmem>>, vector<8x512xf32>
    %c0_66 = arith.constant 0 : index
    %c0_67 = arith.constant 0 : index
    %237 = vector.load %arg3[%c0_66, %c0_67] : memref<128x512xf32, #tpu.memory_space<vmem>>, vector<128x512xf32>
    %cst_68 = arith.constant dense<0.000000e+00> : vector<8x512xf32>
    %238 = tpu.matmul %232, %237, %cst_68 {dimension_numbers = #tpu.dot_dimension_numbers<[1], [0], [0], [1], [0, 0, 1, 1], [], []>} : vector<8x128xf32>, vector<128x512xf32>, vector<8x512xf32> -> vector<8x512xf32>
    %239 = arith.addf %236, %238 : vector<8x512xf32>
    %240 = vector.extract_strided_slice %239 {offsets = [0, 0], sizes = [8, 128], strides = [1, 1]} : vector<8x512xf32> to vector<8x128xf32>
    %241 = arith.negf %240 : vector<8x128xf32>
    %242 = math.exp %241 : vector<8x128xf32>
    %cst_69 = arith.constant 1.000000e+00 : f32
    %243 = vector.broadcast %cst_69 : f32 to vector<8x128xf32>
    %244 = arith.addf %243, %242 : vector<8x128xf32>
    %245 = arith.divf %243, %244 : vector<8x128xf32>
    %246 = vector.extract_strided_slice %239 {offsets = [0, 128], sizes = [8, 128], strides = [1, 1]} : vector<8x512xf32> to vector<8x128xf32>
    %247 = arith.negf %246 : vector<8x128xf32>
    %248 = math.exp %247 : vector<8x128xf32>
    %cst_70 = arith.constant 1.000000e+00 : f32
    %249 = vector.broadcast %cst_70 : f32 to vector<8x128xf32>
    %250 = arith.addf %249, %248 : vector<8x128xf32>
    %251 = arith.divf %249, %250 : vector<8x128xf32>
    %252 = vector.extract_strided_slice %239 {offsets = [0, 256], sizes = [8, 128], strides = [1, 1]} : vector<8x512xf32> to vector<8x128xf32>
    %253 = math.tanh %252 : vector<8x128xf32>
    %254 = vector.extract_strided_slice %239 {offsets = [0, 384], sizes = [8, 128], strides = [1, 1]} : vector<8x512xf32> to vector<8x128xf32>
    %255 = arith.negf %254 : vector<8x128xf32>
    %256 = math.exp %255 : vector<8x128xf32>
    %cst_71 = arith.constant 1.000000e+00 : f32
    %257 = vector.broadcast %cst_71 : f32 to vector<8x128xf32>
    %258 = arith.addf %257, %256 : vector<8x128xf32>
    %259 = arith.divf %257, %258 : vector<8x128xf32>
    %260 = arith.mulf %251, %230 : vector<8x128xf32>
    %261 = arith.mulf %245, %253 : vector<8x128xf32>
    %262 = arith.addf %260, %261 : vector<8x128xf32>
    %263 = math.tanh %262 : vector<8x128xf32>
    %264 = arith.mulf %259, %263 : vector<8x128xf32>
    %c8_i32_72 = arith.constant 8 : i32
    %c0_73 = arith.constant 0 : index
    %c0_74 = arith.constant 0 : index
    %265 = vector.load %arg5[%c0_73, %c0_74] : memref<128x128xf32, #tpu.memory_space<vmem>>, vector<128x128xf32>
    %cst_75 = arith.constant dense<0.000000e+00> : vector<8x128xf32>
    %266 = tpu.matmul %264, %265, %cst_75 {dimension_numbers = #tpu.dot_dimension_numbers<[1], [0], [0], [1], [0, 0, 1, 1], [], []>} : vector<8x128xf32>, vector<128x128xf32>, vector<8x128xf32> -> vector<8x128xf32>
    %c0_76 = arith.constant 0 : index
    %c0_77 = arith.constant 0 : index
    %267 = vector.load %arg6[%c0_76, %c0_77] : memref<1x128xf32, #tpu.memory_space<vmem>>, vector<1x128xf32>
    %268 = vector.broadcast %267 : vector<1x128xf32> to vector<8x128xf32>
    %269 = arith.addf %266, %268 : vector<8x128xf32>
    %cst_78 = arith.constant 0.000000e+00 : f32
    %270 = vector.broadcast %cst_78 : f32 to vector<8x128xf32>
    %271 = arith.maximumf %269, %270 : vector<8x128xf32>
    %c0_79 = arith.constant 0 : index
    %c0_80 = arith.constant 0 : index
    %272 = vector.load %arg7[%c0_79, %c0_80] : memref<1x128xf32, #tpu.memory_space<vmem>>, vector<1x128xf32>
    %273 = vector.broadcast %272 : vector<1x128xf32> to vector<8x128xf32>
    %274 = arith.mulf %271, %273 : vector<8x128xf32>
    %cst_81 = arith.constant dense<0.000000e+00> : vector<8xf32>
    %275 = vector.multi_reduction <add>, %274, %cst_81 [1] : vector<8x128xf32> to vector<8xf32>
    %276 = vector.shape_cast %275 : vector<8xf32> to vector<8x1xf32>
    %c0_82 = arith.constant 0 : index
    %c0_83 = arith.constant 0 : index
    %277 = vector.load %arg8[%c0_82, %c0_83] : memref<1x1xf32, #tpu.memory_space<vmem>>, vector<1x1xf32>
    %278 = vector.broadcast %277 : vector<1x1xf32> to vector<8x1xf32>
    %279 = arith.addf %276, %278 : vector<8x1xf32>
    %280 = arith.negf %279 : vector<8x1xf32>
    %281 = math.exp %280 : vector<8x1xf32>
    %cst_84 = arith.constant 1.000000e+00 : f32
    %282 = vector.broadcast %cst_84 : f32 to vector<8x1xf32>
    %283 = arith.addf %282, %281 : vector<8x1xf32>
    %284 = arith.divf %282, %283 : vector<8x1xf32>
    %c0_85 = arith.constant 0 : index
    %c0_86 = arith.constant 0 : index
    %285 = vector.load %arg9[%c0_85, %c0_86] : memref<8x1xf32, #tpu.memory_space<vmem>>, vector<8x1xf32>
    tpu.vector_store %arg9[%c0_85, %c0_86], %284 {strides = array<i32>} : memref<8x1xf32, #tpu.memory_space<vmem>>, vector<8x1xf32>,
    return
  }
  func.func @transform_0(%arg0: i32) -> (i32, i32) {
    %c0_i32 = arith.constant 0 : i32
    %c0_i32_0 = arith.constant 0 : i32
    %c0_i32_1 = arith.constant 0 : i32
    return %c0_i32, %c0_i32_0 : i32, i32
  }
  func.func @transform_1(%arg0: i32) -> (i32, i32) {
    %c0_i32 = arith.constant 0 : i32
    %c0_i32_0 = arith.constant 0 : i32
    %c0_i32_1 = arith.constant 0 : i32
    return %c0_i32, %c0_i32_0 : i32, i32
  }
  func.func @transform_2(%arg0: i32) -> (i32, i32) {
    %c0_i32 = arith.constant 0 : i32
    %c0_i32_0 = arith.constant 0 : i32
    %c0_i32_1 = arith.constant 0 : i32
    return %c0_i32, %c0_i32_0 : i32, i32
  }
  func.func @transform_3(%arg0: i32) -> (i32, i32) {
    %c0_i32 = arith.constant 0 : i32
    %c0_i32_0 = arith.constant 0 : i32
    %c0_i32_1 = arith.constant 0 : i32
    return %c0_i32, %c0_i32_0 : i32, i32
  }
  func.func @transform_4(%arg0: i32) -> (i32, i32) {
    %c0_i32 = arith.constant 0 : i32
    %c0_i32_0 = arith.constant 0 : i32
    %c0_i32_1 = arith.constant 0 : i32
    return %c0_i32, %c0_i32_0 : i32, i32
  }
  func.func @transform_5(%arg0: i32) -> (i32, i32) {
    %c0_i32 = arith.constant 0 : i32
    %c0_i32_0 = arith.constant 0 : i32
    %c0_i32_1 = arith.constant 0 : i32
    return %c0_i32, %c0_i32_0 : i32, i32
  }
  func.func @transform_6(%arg0: i32) -> (i32, i32) {
    %c0_i32 = arith.constant 0 : i32
    %c0_i32_0 = arith.constant 0 : i32
    %c0_i32_1 = arith.constant 0 : i32
    return %c0_i32, %c0_i32_0 : i32, i32
  }
  func.func @transform_7(%arg0: i32) -> (i32, i32) {
    %c0_i32 = arith.constant 0 : i32
    %c0_i32_0 = arith.constant 0 : i32
    %c0_i32_1 = arith.constant 0 : i32
    return %c0_i32, %c0_i32_0 : i32, i32
  }
  func.func @transform_8(%arg0: i32) -> (i32, i32) {
    %c0_i32 = arith.constant 0 : i32
    %c0_i32_0 = arith.constant 0 : i32
    %c0_i32_1 = arith.constant 0 : i32
    return %c0_i32, %c0_i32_0 : i32, i32
  }
}

</mosaic_0001>

<llo_original>
// kernel: tpu_custom_call.1
$region0: #{tpu_custom_call.1}
  #allocation0 [shape = 'u32[]', space=smem, size = 0x4, offset = 0x4, fixed_abs, tag = 'smem constant byte address 0x4 - core index']
  #allocation1 [shape = 'u32[144,128]{1,0:T(1,128)}', space=vmem, size = 0x12000, scoped, tag = 'internal scratch']
  #allocation2 [shape = 'f32[64,512]{1,0:T(8,128)}', space=vmem, size = 0x20000, scoped, tag = 'scratch operand']
  #allocation3 [shape = 'f32[1,1]{1,0:T(1,128)S(1)}', space=vmem, size = 0x200, scoped, tag = 'scoped memory for tpu_custom_call.1']
  %s0 = inlined_call_operand.vmem [shape: f32[64,32], index: 0, kind: input, shape index: {}]
  %s1 = inlined_call_operand.hbm [shape: f32[32,512], index: 1, kind: input, shape index: {}]
  %s2 = inlined_call_operand.hbm [shape: f32[128,512], index: 2, kind: input, shape index: {}]
  %s3 = inlined_call_operand.vmem [shape: f32[1,512], index: 3, kind: input, shape index: {}]
  %s4 = inlined_call_operand.hbm [shape: f32[128,128], index: 4, kind: input, shape index: {}]
  %s5 = inlined_call_operand.vmem [shape: f32[1,128], index: 5, kind: input, shape index: {}]
  %s6 = inlined_call_operand.vmem [shape: f32[1,128], index: 6, kind: input, shape index: {}]
  %s7 = inlined_call_operand.<no memory space> [shape: f32[1,1], index: 7, kind: input, shape index: {}]
  %s8 = inlined_call_operand.vmem [shape: f32[8,1], index: 8, kind: output, shape index: {}]
  %s9 = sld [smem:[#allocation0]]
  $region54: #{tpu_custom_call.1} parent=0
    _
  %s11 = ssub.s32 1, %s9
  %s12 = scalar_select 0, %s11, %s9
  %v13 = vstv %s7
  %14 = vst [vmem:[#allocation3] sm:$0x1] %v13
  $region1: #{tpu_custom_call.1} parent=0
    #allocation4 [shape = 'u8[65536]{0}', space=vmem, size = 0x10000, scoped, tag = 'input window, operand 1, single buffered']
    #allocation5 [shape = 's32[1]{0}', space=sflag, size = 0x4, scoped, tag = 'scoped memory for tpu_custom_call.1']
    #allocation6 [shape = 'u8[262144]{0}', space=vmem, size = 0x40000, scoped, tag = 'input window, operand 2, single buffered']
    #allocation7 [shape = 's32[1]{0}', space=sflag, size = 0x4, scoped, tag = 'scoped memory for tpu_custom_call.1']
    #allocation8 [shape = 'u8[65536]{0}', space=vmem, size = 0x10000, scoped, tag = 'input window, operand 4, single buffered']
    %15 = vsyncpa [#allocation5], 0
    %16 = vsyncpa [#allocation7], 0
    // Predicated region
    $region2: #{tpu_custom_call.1} parent=1 // pred_check
      _
    $region3: #{tpu_custom_call.1} parent=1 // pred_check_branch
      %18 = sbr.rel (0) target = $region5
    $region4: #{tpu_custom_call.1} parent=1 // pred_region
      _
    $region5: #{tpu_custom_call.1} parent=1 // pred_fallthru
      _
    // Predicated region
    $region6: #{tpu_custom_call.1} parent=1 // pred_check
      _
    $region7: #{tpu_custom_call.1} parent=1 // pred_check_branch
      %20 = sbr.rel (0) target = $region9
    $region8: #{tpu_custom_call.1} parent=1 // pred_region
      %s22 = ssub.s32 2048, 2048
      %23 = vsyncadd [#allocation5], %s22
      %s24 = sshll.u32 [#allocation4], 4
      %s25 = int_to_ptr.vmem [resolvable:$true] %s24
      %30 = dma.hbm_to_vmem [thread:$0]  %s1, 2048, %s25, [#allocation5], 512, 512, 32
    $region9: #{tpu_custom_call.1} parent=1 // pred_fallthru
      _
    // Predicated region
    $region10: #{tpu_custom_call.1} parent=1 // pred_check
      _
    $region11: #{tpu_custom_call.1} parent=1 // pred_check_branch
      %32 = sbr.rel (0) target = $region13
    $region12: #{tpu_custom_call.1} parent=1 // pred_region
      %s34 = ssub.s32 8192, 8192
      %35 = vsyncadd [#allocation7], %s34
      %s36 = sshll.u32 [#allocation6], 4
      %s37 = int_to_ptr.vmem [resolvable:$true] %s36
      %42 = dma.hbm_to_vmem [thread:$0]  %s2, 8192, %s37, [#allocation7], 512, 512, 32
    $region13: #{tpu_custom_call.1} parent=1 // pred_fallthru
      _
    // Predicated region
    $region14: #{tpu_custom_call.1} parent=1 // pred_check
      _
    $region15: #{tpu_custom_call.1} parent=1 // pred_check_branch
      %44 = sbr.rel (0) target = $region17
    $region16: #{tpu_custom_call.1} parent=1 // pred_region
      _
    $region17: #{tpu_custom_call.1} parent=1 // pred_fallthru
      _
    // Predicated region
    $region18: #{tpu_custom_call.1} parent=1 // pred_check
      _
    $region19: #{tpu_custom_call.1} parent=1 // pred_check_branch
      %46 = sbr.rel (0) target = $region21
    $region20: #{tpu_custom_call.1} parent=1 // pred_region
      %s48 = ssub.s32 2048, 2048
      %49 = vsyncadd [#allocation7], %s48
      %s50 = sshll.u32 [#allocation8], 4
      %s51 = int_to_ptr.vmem [resolvable:$true] %s50
      %56 = dma.hbm_to_vmem [thread:$0]  %s4, 2048, %s51, [#allocation7], 128, 128, 8
    $region21: #{tpu_custom_call.1} parent=1 // pred_fallthru
      _
    // Predicated region
    $region22: #{tpu_custom_call.1} parent=1 // pred_check
      _
    $region23: #{tpu_custom_call.1} parent=1 // pred_check_branch
      %58 = sbr.rel (0) target = $region25
    $region24: #{tpu_custom_call.1} parent=1 // pred_region
      _
    $region25: #{tpu_custom_call.1} parent=1 // pred_fallthru
      _
    // Predicated region
    $region26: #{tpu_custom_call.1} parent=1 // pred_check
      _
    $region27: #{tpu_custom_call.1} parent=1 // pred_check_branch
      %60 = sbr.rel (0) target = $region29
    $region28: #{tpu_custom_call.1} parent=1 // pred_region
      _
    $region29: #{tpu_custom_call.1} parent=1 // pred_fallthru
      _
    // Predicated region
    $region30: #{tpu_custom_call.1} parent=1 // pred_check
      _
    $region31: #{tpu_custom_call.1} parent=1 // pred_check_branch
      %62 = sbr.rel (0) target = $region33
    $region32: #{tpu_custom_call.1} parent=1 // pred_region
      _
    $region33: #{tpu_custom_call.1} parent=1 // pred_fallthru
      _
    // Predicated region
    $region34: #{tpu_custom_call.1} parent=1 // pred_check
      _
    $region35: #{tpu_custom_call.1} parent=1 // pred_check_branch
      %64 = sbr.rel (0) target = $region37
    $region36: #{tpu_custom_call.1} parent=1 // pred_region
      %65 = dma.done [#allocation5], 2048
    $region37: #{tpu_custom_call.1} parent=1 // pred_fallthru
      _
    // Predicated region
    $region38: #{tpu_custom_call.1} parent=1 // pred_check
      _
    $region39: #{tpu_custom_call.1} parent=1 // pred_check_branch
      %67 = sbr.rel (0) target = $region41
    $region40: #{tpu_custom_call.1} parent=1 // pred_region
      %68 = dma.done [#allocation7], 8192
    $region41: #{tpu_custom_call.1} parent=1 // pred_fallthru
      _
    // Predicated region
    $region42: #{tpu_custom_call.1} parent=1 // pred_check
      _
    $region43: #{tpu_custom_call.1} parent=1 // pred_check_branch
      %70 = sbr.rel (0) target = $region45
    $region44: #{tpu_custom_call.1} parent=1 // pred_region
      %71 = dma.done [#allocation7], 2048
    $region45: #{tpu_custom_call.1} parent=1 // pred_fallthru
      _
    %v72 = vld [vmem:[%s0] sm:$0xff]
    %v73 = vld [vmem:[%s0 + $0x8] sm:$0xff]
    %v74 = vld [vmem:[%s0 + $0x10] sm:$0xff]
    %v75 = vld [vmem:[%s0 + $0x18] sm:$0xff]
    %v76 = vld [vmem:[%s0 + $0x20] sm:$0xff]
    %v77 = vld [vmem:[%s0 + $0x28] sm:$0xff]
    %v78 = vld [vmem:[%s0 + $0x30] sm:$0xff]
    %v79 = vld [vmem:[%s0 + $0x38] sm:$0xff]
    %v80 = vld [vmem:[#allocation4] sm:$0xff]
    %v81 = vld [vmem:[#allocation4 + $0x8] sm:$0xff]
    %v82 = vld [vmem:[#allocation4 + $0x10] sm:$0xff]
    %v83 = vld [vmem:[#allocation4 + $0x18] sm:$0xff]
    %v84 = vld [vmem:[#allocation4 + $0x20] sm:$0xff]
    %v85 = vld [vmem:[#allocation4 + $0x28] sm:$0xff]
    %v86 = vld [vmem:[#allocation4 + $0x30] sm:$0xff]
    %v87 = vld [vmem:[#allocation4 + $0x38] sm:$0xff]
    %v88 = vld [vmem:[#allocation4 + $0x40] sm:$0xff]
    %v89 = vld [vmem:[#allocation4 + $0x48] sm:$0xff]
    %v90 = vld [vmem:[#allocation4 + $0x50] sm:$0xff]
    %v91 = vld [vmem:[#allocation4 + $0x58] sm:$0xff]
    %v92 = vld [vmem:[#allocation4 + $0x60] sm:$0xff]
    %v93 = vld [vmem:[#allocation4 + $0x68] sm:$0xff]
    %v94 = vld [vmem:[#allocation4 + $0x70] sm:$0xff]
    %v95 = vld [vmem:[#allocation4 + $0x78] sm:$0xff]
    %v96 = vld [vmem:[%s3] sm:$0xf]
    %v98 = vlaneseq
    %v99 = vshrl.u32 %v98, 7
    %v100 = vsub.s32 0, %v99
    %v101 = vrot.slane %v96, %v100
    %v102 = vlaneseq
    %v103 = vshrl.u32 %v102, 7
    %v104 = vsub.s32 1, %v103
    %v105 = vrot.slane %v96, %v104
    %v106 = vlaneseq
    %v107 = vshrl.u32 %v106, 7
    %v108 = vsub.s32 2, %v107
    %v109 = vrot.slane %v96, %v108
    %v110 = vlaneseq
    %v111 = vshrl.u32 %v110, 7
    %v112 = vsub.s32 3, %v111
    %v113 = vrot.slane %v96, %v112
    %vm118 = vcmask 261120
    %v120 = vsel %vm118, %v72, 0
    %v123 = vsel %vm118, %v73, 0
    %v126 = vsel %vm118, %v74, 0
    %v129 = vsel %vm118, %v75, 0
    %v132 = vsel %vm118, %v76, 0
    %v135 = vsel %vm118, %v77, 0
    %v138 = vsel %vm118, %v78, 0
    %v141 = vsel %vm118, %v79, 0
    %143 = vmatprep.subr.mxu0 0.0
    %144 = vmatpush1.msra.mxu0 0.0
    %145 = vmatprep.subr.mxu0 0.0
    %146 = vmatpush1.msra.mxu0 0.0
    %147 = vmatprep.subr.mxu0 0.0
    %148 = vmatpush1.msra.mxu0 0.0
    %149 = vmatprep.subr.mxu0 0.0
    %150 = vmatpush1.msra.mxu0 0.0
    %151 = vmatprep.subr.mxu0 0.0
    %152 = vmatpush1.msra.mxu0 0.0
    %153 = vmatprep.subr.mxu0 0.0
    %154 = vmatpush1.msra.mxu0 0.0
    %155 = vmatprep.subr.mxu0 0.0
    %156 = vmatpush1.msra.mxu0 0.0
    %157 = vmatprep.subr.mxu0 0.0
    %158 = vmatpush1.msra.mxu0 0.0
    %159 = vmatprep.subr.mxu0 0.0
    %160 = vmatpush1.msra.mxu0 0.0
    %161 = vmatprep.subr.mxu0 0.0
    %162 = vmatpush1.msra.mxu0 0.0
    %163 = vmatprep.subr.mxu0 0.0
    %164 = vmatpush1.msra.mxu0 0.0
    %165 = vmatprep.subr.mxu0 0.0
    %166 = vmatpush1.msra.mxu0 0.0
    %167 = vmatprep.subr.mxu0 %v93
    %168 = vmatpush1.msra.mxu0 %v92
    %169 = vmatprep.subr.mxu0 %v89
    %170 = vmatpush1.msra.mxu0 %v88
    %171 = vmatprep.subr.mxu0 %v85
    %172 = vmatpush1.msra.mxu0 %v84
    %173 = vmatprep.subr.mxu0 %v81
    %174 = vmatpush1.msra.mxu0 %v80
    %175 = vmatprep.subr.mxu0 0.0
    %176 = vmatpush2.msra.mxu0 0.0
    %177 = vmatprep.subr.mxu0 0.0
    %178 = vmatpush2.msra.mxu0 0.0
    %179 = vmatprep.subr.mxu0 0.0
    %180 = vmatpush2.msra.mxu0 0.0
    %181 = vmatprep.subr.mxu0 0.0
    %182 = vmatpush2.msra.mxu0 0.0
    %183 = vmatprep.subr.mxu0 0.0
    %184 = vmatpush2.msra.mxu0 0.0
    %185 = vmatprep.subr.mxu0 0.0
    %186 = vmatpush2.msra.mxu0 0.0
    %187 = vmatprep.subr.mxu0 0.0
    %188 = vmatpush2.msra.mxu0 0.0
    %189 = vmatprep.subr.mxu0 0.0
    %190 = vmatpush2.msra.mxu0 0.0
    %191 = vmatprep.subr.mxu0 0.0
    %192 = vmatpush2.msra.mxu0 0.0
    %193 = vmatprep.subr.mxu0 0.0
    %194 = vmatpush2.msra.mxu0 0.0
    %195 = vmatprep.subr.mxu0 0.0
    %196 = vmatpush2.msra.mxu0 0.0
    %197 = vmatprep.subr.mxu0 0.0
    %198 = vmatpush2.msra.mxu0 0.0
    %199 = vmatprep.subr.mxu0 0.0
    %200 = vmatpush2.msra.mxu0 0.0
    %201 = vmatprep.subr.mxu0 0.0
    %202 = vmatpush2.msra.mxu0 0.0
    %203 = vmatprep.subr.mxu0 0.0
    %204 = vmatpush2.msra.mxu0 0.0
    %205 = vmatprep.subr.mxu0 0.0
    %206 = vmatpush2.msra.mxu0 0.0
    %207 = vmatprep.mubr.f32.mxu0 0.0
    %208 = vmatmul.mubr.f32.gmra.mxu0 %v120
    %v209 = vpop.f32.mrf.mxu0
    %v210 = vadd.f32 %v101, %v209
    %v211 = vpop.f32.mrf.mxu0
    %v212 = vadd.f32 %v105, %v211
    %213 = vmatprep.mubr.f32.mxu0 0.0
    %214 = vmatmul.mubr.f32.gmra.mxu0 %v123
    %v215 = vpop.f32.mrf.mxu0
    %v216 = vadd.f32 %v101, %v215
    %v217 = vpop.f32.mrf.mxu0
    %v218 = vadd.f32 %v105, %v217
    %219 = vmatprep.mubr.f32.mxu0 0.0
    %220 = vmatmul.mubr.f32.gmra.mxu0 %v126
    %v221 = vpop.f32.mrf.mxu0
    %v222 = vadd.f32 %v101, %v221
    %v223 = vpop.f32.mrf.mxu0
    %v224 = vadd.f32 %v105, %v223
    %225 = vmatprep.mubr.f32.mxu0 0.0
    %226 = vmatmul.mubr.f32.gmra.mxu0 %v129
    %v227 = vpop.f32.mrf.mxu0
    %v228 = vadd.f32 %v101, %v227
    %v229 = vpop.f32.mrf.mxu0
    %v230 = vadd.f32 %v105, %v229
    %231 = vmatprep.mubr.f32.mxu0 0.0
    %232 = vmatmul.mubr.f32.gmra.mxu0 %v132
    %v233 = vpop.f32.mrf.mxu0
    %v234 = vadd.f32 %v101, %v233
    %v235 = vpop.f32.mrf.mxu0
    %v236 = vadd.f32 %v105, %v235
    %237 = vmatprep.mubr.f32.mxu0 0.0
    %238 = vmatmul.mubr.f32.gmra.mxu0 %v135
    %v239 = vpop.f32.mrf.mxu0
    %v240 = vadd.f32 %v101, %v239
    %v241 = vpop.f32.mrf.mxu0
    %v242 = vadd.f32 %v105, %v241
    %243 = vmatprep.mubr.f32.mxu0 0.0
    %244 = vmatmul.mubr.f32.gmra.mxu0 %v138
    %v245 = vpop.f32.mrf.mxu0
    %v246 = vadd.f32 %v101, %v245
    %v247 = vpop.f32.mrf.mxu0
    %v248 = vadd.f32 %v105, %v247
    %249 = vmatprep.mubr.f32.mxu0 0.0
    %250 = vmatmul.mubr.f32.gmra.mxu0 %v141
    %v251 = vpop.f32.mrf.mxu0
    %v252 = vadd.f32 %v101, %v251
    %v253 = vpop.f32.mrf.mxu0
    %v254 = vadd.f32 %v105, %v253
    %255 = vdwg.mxu0
    %256 = vmatprep.subr.mxu0 0.0
    %257 = vmatpush1.msra.mxu0 0.0
    %258 = vmatprep.subr.mxu0 0.0
    %259 = vmatpush1.msra.mxu0 0.0
    %260 = vmatprep.subr.mxu0 0.0
    %261 = vmatpush1.msra.mxu0 0.0
    %262 = vmatprep.subr.mxu0 0.0
    %263 = vmatpush1.msra.mxu0 0.0
    %264 = vmatprep.subr.mxu0 0.0
    %265 = vmatpush1.msra.mxu0 0.0
    %266 = vmatprep.subr.mxu0 0.0
    %267 = vmatpush1.msra.mxu0 0.0
    %268 = vmatprep.subr.mxu0 0.0
    %269 = vmatpush1.msra.mxu0 0.0
    %270 = vmatprep.subr.mxu0 0.0
    %271 = vmatpush1.msra.mxu0 0.0
    %272 = vmatprep.subr.mxu0 0.0
    %273 = vmatpush1.msra.mxu0 0.0
    %274 = vmatprep.subr.mxu0 0.0
    %275 = vmatpush1.msra.mxu0 0.0
    %276 = vmatprep.subr.mxu0 0.0
    %277 = vmatpush1.msra.mxu0 0.0
    %278 = vmatprep.subr.mxu0 0.0
    %279 = vmatpush1.msra.mxu0 0.0
    %280 = vmatprep.subr.mxu0 %v95
    %281 = vmatpush1.msra.mxu0 %v94
    %282 = vmatprep.subr.mxu0 %v91
    %283 = vmatpush1.msra.mxu0 %v90
    %284 = vmatprep.subr.mxu0 %v87
    %285 = vmatpush1.msra.mxu0 %v86
    %286 = vmatprep.subr.mxu0 %v83
    %287 = vmatpush1.msra.mxu0 %v82
    %288 = vmatprep.subr.mxu0 0.0
    %289 = vmatpush2.msra.mxu0 0.0
    %290 = vmatprep.subr.mxu0 0.0
    %291 = vmatpush2.msra.mxu0 0.0
    %292 = vmatprep.subr.mxu0 0.0
    %293 = vmatpush2.msra.mxu0 0.0
    %294 = vmatprep.subr.mxu0 0.0
    %295 = vmatpush2.msra.mxu0 0.0
    %296 = vmatprep.subr.mxu0 0.0
    %297 = vmatpush2.msra.mxu0 0.0
    %298 = vmatprep.subr.mxu0 0.0
    %299 = vmatpush2.msra.mxu0 0.0
    %300 = vmatprep.subr.mxu0 0.0
    %301 = vmatpush2.msra.mxu0 0.0
    %302 = vmatprep.subr.mxu0 0.0
    %303 = vmatpush2.msra.mxu0 0.0
    %304 = vmatprep.subr.mxu0 0.0
    %305 = vmatpush2.msra.mxu0 0.0
    %306 = vmatprep.subr.mxu0 0.0
    %307 = vmatpush2.msra.mxu0 0.0
    %308 = vmatprep.subr.mxu0 0.0
    %309 = vmatpush2.msra.mxu0 0.0
    %310 = vmatprep.subr.mxu0 0.0
    %311 = vmatpush2.msra.mxu0 0.0
    %312 = vmatprep.subr.mxu0 0.0
    %313 = vmatpush2.msra.mxu0 0.0
    %314 = vmatprep.subr.mxu0 0.0
    %315 = vmatpush2.msra.mxu0 0.0
    %316 = vmatprep.subr.mxu0 0.0
    %317 = vmatpush2.msra.mxu0 0.0
    %318 = vmatprep.subr.mxu0 0.0
    %319 = vmatpush2.msra.mxu0 0.0
    %320 = vmatprep.mubr.f32.mxu0 0.0
    %321 = vmatmul.mubr.f32.gmra.mxu0 %v120
    %v322 = vpop.f32.mrf.mxu0
    %v323 = vadd.f32 %v109, %v322
    %v324 = vpop.f32.mrf.mxu0
    %v325 = vadd.f32 %v113, %v324
    %326 = vmatprep.mubr.f32.mxu0 0.0
    %327 = vmatmul.mubr.f32.gmra.mxu0 %v123
    %v328 = vpop.f32.mrf.mxu0
    %v329 = vadd.f32 %v109, %v328
    %v330 = vpop.f32.mrf.mxu0
    %v331 = vadd.f32 %v113, %v330
    %332 = vmatprep.mubr.f32.mxu0 0.0
    %333 = vmatmul.mubr.f32.gmra.mxu0 %v126
    %v334 = vpop.f32.mrf.mxu0
    %v335 = vadd.f32 %v109, %v334
    %v336 = vpop.f32.mrf.mxu0
    %v337 = vadd.f32 %v113, %v336
    %338 = vmatprep.mubr.f32.mxu0 0.0
    %339 = vmatmul.mubr.f32.gmra.mxu0 %v129
    %v340 = vpop.f32.mrf.mxu0
    %v341 = vadd.f32 %v109, %v340
    %v342 = vpop.f32.mrf.mxu0
    %v343 = vadd.f32 %v113, %v342
    %344 = vmatprep.mubr.f32.mxu0 0.0
    %345 = vmatmul.mubr.f32.gmra.mxu0 %v132
    %v346 = vpop.f32.mrf.mxu0
    %v347 = vadd.f32 %v109, %v346
    %v348 = vpop.f32.mrf.mxu0
    %v349 = vadd.f32 %v113, %v348
    %350 = vmatprep.mubr.f32.mxu0 0.0
    %351 = vmatmul.mubr.f32.gmra.mxu0 %v135
    %v352 = vpop.f32.mrf.mxu0
    %v353 = vadd.f32 %v109, %v352
    %v354 = vpop.f32.mrf.mxu0
    %v355 = vadd.f32 %v113, %v354
    %356 = vmatprep.mubr.f32.mxu0 0.0
    %357 = vmatmul.mubr.f32.gmra.mxu0 %v138
    %v358 = vpop.f32.mrf.mxu0
    %v359 = vadd.f32 %v109, %v358
    %v360 = vpop.f32.mrf.mxu0
    %v361 = vadd.f32 %v113, %v360
    %362 = vmatprep.mubr.f32.mxu0 0.0
    %363 = vmatmul.mubr.f32.gmra.mxu0 %v141
    %v364 = vpop.f32.mrf.mxu0
    %v365 = vadd.f32 %v109, %v364
    %v366 = vpop.f32.mrf.mxu0
    %v367 = vadd.f32 %v113, %v366
    %368 = vdwg.mxu0
    %369 = vst [vmem:[#allocation2] sm:$0xff] %v210
    %370 = vst [vmem:[#allocation2 + $0x8] sm:$0xff] %v212
    %371 = vst [vmem:[#allocation2 + $0x10] sm:$0xff] %v323
    %372 = vst [vmem:[#allocation2 + $0x18] sm:$0xff] %v325
    %373 = vst [vmem:[#allocation2 + $0x20] sm:$0xff] %v216
    %374 = vst [vmem:[#allocation2 + $0x28] sm:$0xff] %v218
    %375 = vst [vmem:[#allocation2 + $0x30] sm:$0xff] %v329
    %376 = vst [vmem:[#allocation2 + $0x38] sm:$0xff] %v331
    %377 = vst [vmem:[#allocation2 + $0x40] sm:$0xff] %v222
    %378 = vst [vmem:[#allocation2 + $0x48] sm:$0xff] %v224
    %379 = vst [vmem:[#allocation2 + $0x50] sm:$0xff] %v335
    %380 = vst [vmem:[#allocation2 + $0x58] sm:$0xff] %v337
    %381 = vst [vmem:[#allocation2 + $0x60] sm:$0xff] %v228
    %382 = vst [vmem:[#allocation2 + $0x68] sm:$0xff] %v230
    %383 = vst [vmem:[#allocation2 + $0x70] sm:$0xff] %v341
    %384 = vst [vmem:[#allocation2 + $0x78] sm:$0xff] %v343
    %385 = vst [vmem:[#allocation2 + $0x80] sm:$0xff] %v234
    %386 = vst [vmem:[#allocation2 + $0x88] sm:$0xff] %v236
    %387 = vst [vmem:[#allocation2 + $0x90] sm:$0xff] %v347
    %388 = vst [vmem:[#allocation2 + $0x98] sm:$0xff] %v349
    %389 = vst [vmem:[#allocation2 + $0xa0] sm:$0xff] %v240
    %390 = vst [vmem:[#allocation2 + $0xa8] sm:$0xff] %v242
    %391 = vst [vmem:[#allocation2 + $0xb0] sm:$0xff] %v353
    %392 = vst [vmem:[#allocation2 + $0xb8] sm:$0xff] %v355
    %393 = vst [vmem:[#allocation2 + $0xc0] sm:$0xff] %v246
    %394 = vst [vmem:[#allocation2 + $0xc8] sm:$0xff] %v248
    %395 = vst [vmem:[#allocation2 + $0xd0] sm:$0xff] %v359
    %396 = vst [vmem:[#allocation2 + $0xd8] sm:$0xff] %v361
    %397 = vst [vmem:[#allocation2 + $0xe0] sm:$0xff] %v252
    %398 = vst [vmem:[#allocation2 + $0xe8] sm:$0xff] %v254
    %399 = vst [vmem:[#allocation2 + $0xf0] sm:$0xff] %v365
    %400 = vst [vmem:[#allocation2 + $0xf8] sm:$0xff] %v367
    %s401 = smul.u32 0, 4
    %s402 = smul.addr %s401, 8
    %s403 = scalar_lea.vmem [#allocation2], %s402
    %v404 = vld [vmem:[%s403] sm:$0xff]
    %v405 = vld [vmem:[%s403 + $0x8] sm:$0xff]
    %v406 = vld [vmem:[%s403 + $0x10] sm:$0xff]
    %v407 = vld [vmem:[%s403 + $0x18] sm:$0xff]
    %v408 = vld [vmem:[#allocation6] sm:$0xff]
    %v409 = vld [vmem:[#allocation6 + $0x8] sm:$0xff]
    %v410 = vld [vmem:[#allocation6 + $0x10] sm:$0xff]
    %v411 = vld [vmem:[#allocation6 + $0x18] sm:$0xff]
    %v412 = vld [vmem:[#allocation6 + $0x20] sm:$0xff]
    %v413 = vld [vmem:[#allocation6 + $0x28] sm:$0xff]
    %v414 = vld [vmem:[#allocation6 + $0x30] sm:$0xff]
    %v415 = vld [vmem:[#allocation6 + $0x38] sm:$0xff]
    %v416 = vld [vmem:[#allocation6 + $0x40] sm:$0xff]
    %v417 = vld [vmem:[#allocation6 + $0x48] sm:$0xff]
    %v418 = vld [vmem:[#allocation6 + $0x50] sm:$0xff]
    %v419 = vld [vmem:[#allocation6 + $0x58] sm:$0xff]
    %v420 = vld [vmem:[#allocation6 + $0x60] sm:$0xff]
    %v421 = vld [vmem:[#allocation6 + $0x68] sm:$0xff]
    %v422 = vld [vmem:[#allocation6 + $0x70] sm:$0xff]
    %v423 = vld [vmem:[#allocation6 + $0x78] sm:$0xff]
    %v424 = vld [vmem:[#allocation6 + $0x80] sm:$0xff]
    %v425 = vld [vmem:[#allocation6 + $0x88] sm:$0xff]
    %v426 = vld [vmem:[#allocation6 + $0x90] sm:$0xff]
    %v427 = vld [vmem:[#allocation6 + $0x98] sm:$0xff]
    %v428 = vld [vmem:[#allocation6 + $0xa0] sm:$0xff]
    %v429 = vld [vmem:[#allocation6 + $0xa8] sm:$0xff]
    %v430 = vld [vmem:[#allocation6 + $0xb0] sm:$0xff]
    %v431 = vld [vmem:[#allocation6 + $0xb8] sm:$0xff]
    %v432 = vld [vmem:[#allocation6 + $0xc0] sm:$0xff]
    %v433 = vld [vmem:[#allocation6 + $0xc8] sm:$0xff]
    %v434 = vld [vmem:[#allocation6 + $0xd0] sm:$0xff]
    %v435 = vld [vmem:[#allocation6 + $0xd8] sm:$0xff]
    %v436 = vld [vmem:[#allocation6 + $0xe0] sm:$0xff]
    %v437 = vld [vmem:[#allocation6 + $0xe8] sm:$0xff]
    %v438 = vld [vmem:[#allocation6 + $0xf0] sm:$0xff]
    %v439 = vld [vmem:[#allocation6 + $0xf8] sm:$0xff]
    %v440 = vld [vmem:[#allocation6 + $0x100] sm:$0xff]
    %v441 = vld [vmem:[#allocation6 + $0x108] sm:$0xff]
    %v442 = vld [vmem:[#allocation6 + $0x110] sm:$0xff]
    %v443 = vld [vmem:[#allocation6 + $0x118] sm:$0xff]
    %v444 = vld [vmem:[#allocation6 + $0x120] sm:$0xff]
    %v445 = vld [vmem:[#allocation6 + $0x128] sm:$0xff]
    %v446 = vld [vmem:[#allocation6 + $0x130] sm:$0xff]
    %v447 = vld [vmem:[#allocation6 + $0x138] sm:$0xff]
    %v448 = vld [vmem:[#allocation6 + $0x140] sm:$0xff]
    %v449 = vld [vmem:[#allocation6 + $0x148] sm:$0xff]
    %v450 = vld [vmem:[#allocation6 + $0x150] sm:$0xff]
    %v451 = vld [vmem:[#allocation6 + $0x158] sm:$0xff]
    %v452 = vld [vmem:[#allocation6 + $0x160] sm:$0xff]
    %v453 = vld [vmem:[#allocation6 + $0x168] sm:$0xff]
    %v454 = vld [vmem:[#allocation6 + $0x170] sm:$0xff]
    %v455 = vld [vmem:[#allocation6 + $0x178] sm:$0xff]
    %v456 = vld [vmem:[#allocation6 + $0x180] sm:$0xff]
    %v457 = vld [vmem:[#allocation6 + $0x188] sm:$0xff]
    %v458 = vld [vmem:[#allocation6 + $0x190] sm:$0xff]
    %v459 = vld [vmem:[#allocation6 + $0x198] sm:$0xff]
    %v460 = vld [vmem:[#allocation6 + $0x1a0] sm:$0xff]
    %v461 = vld [vmem:[#allocation6 + $0x1a8] sm:$0xff]
    %v462 = vld [vmem:[#allocation6 + $0x1b0] sm:$0xff]
    %v463 = vld [vmem:[#allocation6 + $0x1b8] sm:$0xff]
    %v464 = vld [vmem:[#allocation6 + $0x1c0] sm:$0xff]
    %v465 = vld [vmem:[#allocation6 + $0x1c8] sm:$0xff]
    %v466 = vld [vmem:[#allocation6 + $0x1d0] sm:$0xff]
    %v467 = vld [vmem:[#allocation6 + $0x1d8] sm:$0xff]
    %v468 = vld [vmem:[#allocation6 + $0x1e0] sm:$0xff]
    %v469 = vld [vmem:[#allocation6 + $0x1e8] sm:$0xff]
    %v470 = vld [vmem:[#allocation6 + $0x1f0] sm:$0xff]
    %v471 = vld [vmem:[#allocation6 + $0x1f8] sm:$0xff]
    %472 = vmatprep.subr.mxu0 %v469
    %473 = vmatpush1.msra.mxu0 %v468
    %474 = vmatprep.subr.mxu0 %v465
    %475 = vmatpush1.msra.mxu0 %v464
    %476 = vmatprep.subr.mxu0 %v461
    %477 = vmatpush1.msra.mxu0 %v460
    %478 = vmatprep.subr.mxu0 %v457
    %479 = vmatpush1.msra.mxu0 %v456
    %480 = vmatprep.subr.mxu0 %v453
    %481 = vmatpush1.msra.mxu0 %v452
    %482 = vmatprep.subr.mxu0 %v449
    %483 = vmatpush1.msra.mxu0 %v448
    %484 = vmatprep.subr.mxu0 %v445
    %485 = vmatpush1.msra.mxu0 %v444
    %486 = vmatprep.subr.mxu0 %v441
    %487 = vmatpush1.msra.mxu0 %v440
    %488 = vmatprep.subr.mxu0 %v437
    %489 = vmatpush1.msra.mxu0 %v436
    %490 = vmatprep.subr.mxu0 %v433
    %491 = vmatpush1.msra.mxu0 %v432
    %492 = vmatprep.subr.mxu0 %v429
    %493 = vmatpush1.msra.mxu0 %v428
    %494 = vmatprep.subr.mxu0 %v425
    %495 = vmatpush1.msra.mxu0 %v424
    %496 = vmatprep.subr.mxu0 %v421
    %497 = vmatpush1.msra.mxu0 %v420
    %498 = vmatprep.subr.mxu0 %v417
    %499 = vmatpush1.msra.mxu0 %v416
    %500 = vmatprep.subr.mxu0 %v413
    %501 = vmatpush1.msra.mxu0 %v412
    %502 = vmatprep.subr.mxu0 %v409
    %503 = vmatpush1.msra.mxu0 %v408
    %504 = vmatprep.subr.mxu0 0.0
    %505 = vmatpush2.msra.mxu0 0.0
    %506 = vmatprep.subr.mxu0 0.0
    %507 = vmatpush2.msra.mxu0 0.0
    %508 = vmatprep.subr.mxu0 0.0
    %509 = vmatpush2.msra.mxu0 0.0
    %510 = vmatprep.subr.mxu0 0.0
    %511 = vmatpush2.msra.mxu0 0.0
    %512 = vmatprep.subr.mxu0 0.0
    %513 = vmatpush2.msra.mxu0 0.0
    %514 = vmatprep.subr.mxu0 0.0
    %515 = vmatpush2.msra.mxu0 0.0
    %516 = vmatprep.subr.mxu0 0.0
    %517 = vmatpush2.msra.mxu0 0.0
    %518 = vmatprep.subr.mxu0 0.0
    %519 = vmatpush2.msra.mxu0 0.0
    %520 = vmatprep.subr.mxu0 0.0
    %521 = vmatpush2.msra.mxu0 0.0
    %522 = vmatprep.subr.mxu0 0.0
    %523 = vmatpush2.msra.mxu0 0.0
    %524 = vmatprep.subr.mxu0 0.0
    %525 = vmatpush2.msra.mxu0 0.0
    %526 = vmatprep.subr.mxu0 0.0
    %527 = vmatpush2.msra.mxu0 0.0
    %528 = vmatprep.subr.mxu0 0.0
    %529 = vmatpush2.msra.mxu0 0.0
    %530 = vmatprep.subr.mxu0 0.0
    %531 = vmatpush2.msra.mxu0 0.0
    %532 = vmatprep.subr.mxu0 0.0
    %533 = vmatpush2.msra.mxu0 0.0
    %534 = vmatprep.subr.mxu0 0.0
    %535 = vmatpush2.msra.mxu0 0.0
    %536 = vmatprep.mubr.f32.mxu0 0.0
    %537 = vmatmul.mubr.f32.gmra.mxu0 0.0
    %v538 = vpop.f32.mrf.mxu0
    %v539 = vadd.f32 0.0, %v538
    %v540 = vpop.f32.mrf.mxu0
    %v541 = vadd.f32 0.0, %v540
    %542 = vdwg.mxu0
    %543 = vmatprep.subr.mxu0 %v471
    %544 = vmatpush1.msra.mxu0 %v470
    %545 = vmatprep.subr.mxu0 %v467
    %546 = vmatpush1.msra.mxu0 %v466
    %547 = vmatprep.subr.mxu0 %v463
    %548 = vmatpush1.msra.mxu0 %v462
    %549 = vmatprep.subr.mxu0 %v459
    %550 = vmatpush1.msra.mxu0 %v458
    %551 = vmatprep.subr.mxu0 %v455
    %552 = vmatpush1.msra.mxu0 %v454
    %553 = vmatprep.subr.mxu0 %v451
    %554 = vmatpush1.msra.mxu0 %v450
    %555 = vmatprep.subr.mxu0 %v447
    %556 = vmatpush1.msra.mxu0 %v446
    %557 = vmatprep.subr.mxu0 %v443
    %558 = vmatpush1.msra.mxu0 %v442
    %559 = vmatprep.subr.mxu0 %v439
    %560 = vmatpush1.msra.mxu0 %v438
    %561 = vmatprep.subr.mxu0 %v435
    %562 = vmatpush1.msra.mxu0 %v434
    %563 = vmatprep.subr.mxu0 %v431
    %564 = vmatpush1.msra.mxu0 %v430
    %565 = vmatprep.subr.mxu0 %v427
    %566 = vmatpush1.msra.mxu0 %v426
    %567 = vmatprep.subr.mxu0 %v423
    %568 = vmatpush1.msra.mxu0 %v422
    %569 = vmatprep.subr.mxu0 %v419
    %570 = vmatpush1.msra.mxu0 %v418
    %571 = vmatprep.subr.mxu0 %v415
    %572 = vmatpush1.msra.mxu0 %v414
    %573 = vmatprep.subr.mxu0 %v411
    %574 = vmatpush1.msra.mxu0 %v410
    %575 = vmatprep.subr.mxu0 0.0
    %576 = vmatpush2.msra.mxu0 0.0
    %577 = vmatprep.subr.mxu0 0.0
    %578 = vmatpush2.msra.mxu0 0.0
    %579 = vmatprep.subr.mxu0 0.0
    %580 = vmatpush2.msra.mxu0 0.0
    %581 = vmatprep.subr.mxu0 0.0
    %582 = vmatpush2.msra.mxu0 0.0
    %583 = vmatprep.subr.mxu0 0.0
    %584 = vmatpush2.msra.mxu0 0.0
    %585 = vmatprep.subr.mxu0 0.0
    %586 = vmatpush2.msra.mxu0 0.0
    %587 = vmatprep.subr.mxu0 0.0
    %588 = vmatpush2.msra.mxu0 0.0
    %589 = vmatprep.subr.mxu0 0.0
    %590 = vmatpush2.msra.mxu0 0.0
    %591 = vmatprep.subr.mxu0 0.0
    %592 = vmatpush2.msra.mxu0 0.0
    %593 = vmatprep.subr.mxu0 0.0
    %594 = vmatpush2.msra.mxu0 0.0
    %595 = vmatprep.subr.mxu0 0.0
    %596 = vmatpush2.msra.mxu0 0.0
    %597 = vmatprep.subr.mxu0 0.0
    %598 = vmatpush2.msra.mxu0 0.0
    %599 = vmatprep.subr.mxu0 0.0
    %600 = vmatpush2.msra.mxu0 0.0
    %601 = vmatprep.subr.mxu0 0.0
    %602 = vmatpush2.msra.mxu0 0.0
    %603 = vmatprep.subr.mxu0 0.0
    %604 = vmatpush2.msra.mxu0 0.0
    %605 = vmatprep.subr.mxu0 0.0
    %606 = vmatpush2.msra.mxu0 0.0
    %607 = vmatprep.mubr.f32.mxu0 0.0
    %608 = vmatmul.mubr.f32.gmra.mxu0 0.0
    %v609 = vpop.f32.mrf.mxu0
    %v610 = vadd.f32 0.0, %v609
    %v611 = vpop.f32.mrf.mxu0
    %v612 = vadd.f32 0.0, %v611
    %613 = vdwg.mxu0
    %v614 = vadd.f32 %v404, %v539
    %v615 = vadd.f32 %v405, %v541
    %v616 = vadd.f32 %v406, %v610
    %v617 = vadd.f32 %v407, %v612
    %v618 = vxor.u32 %v614, 2147483648
    %v619 = vmul.f32 %v618, 1.442695
    %v620 = vpow.pop %v619
    %v621 = vadd.f32 %v620, 1.0
    %v622 = vrcp.pop %v621
    %v623 = vmul.f32 1.0, %v622
    %v624 = vxor.u32 %v615, 2147483648
    %v625 = vmul.f32 %v624, 1.442695
    %v626 = vpow.pop %v625
    %v627 = vadd.f32 %v626, 1.0
    %v628 = vrcp.pop %v627
    %v629 = vmul.f32 1.0, %v628
    %v630 = vtanh.pop %v616
    %v631 = vxor.u32 %v617, 2147483648
    %v632 = vmul.f32 %v631, 1.442695
    %v633 = vpow.pop %v632
    %v634 = vadd.f32 %v633, 1.0
    %v635 = vrcp.pop %v634
    %v636 = vmul.f32 1.0, %v635
    %v637 = vmul.f32 %v629, 0.0
    %v638 = vmul.f32 %v623, %v630
    %v639 = vadd.f32 %v637, %v638
    %v640 = vtanh.pop %v639
    %v641 = vmul.f32 %v636, %v640
    %s642 = smul.u32 1, 4
    %s643 = smul.addr %s642, 8
    %s644 = scalar_lea.vmem [#allocation2], %s643
    %v645 = vld [vmem:[%s644] sm:$0xff]
    %v646 = vld [vmem:[%s644 + $0x8] sm:$0xff]
    %v647 = vld [vmem:[%s644 + $0x10] sm:$0xff]
    %v648 = vld [vmem:[%s644 + $0x18] sm:$0xff]
    %649 = vmatprep.subr.mxu0 %v469
    %650 = vmatpush1.msra.mxu0 %v468
    %651 = vmatprep.subr.mxu0 %v465
    %652 = vmatpush1.msra.mxu0 %v464
    %653 = vmatprep.subr.mxu0 %v461
    %654 = vmatpush1.msra.mxu0 %v460
    %655 = vmatprep.subr.mxu0 %v457
    %656 = vmatpush1.msra.mxu0 %v456
    %657 = vmatprep.subr.mxu0 %v453
    %658 = vmatpush1.msra.mxu0 %v452
    %659 = vmatprep.subr.mxu0 %v449
    %660 = vmatpush1.msra.mxu0 %v448
    %661 = vmatprep.subr.mxu0 %v445
    %662 = vmatpush1.msra.mxu0 %v444
    %663 = vmatprep.subr.mxu0 %v441
    %664 = vmatpush1.msra.mxu0 %v440
    %665 = vmatprep.subr.mxu0 %v437
    %666 = vmatpush1.msra.mxu0 %v436
    %667 = vmatprep.subr.mxu0 %v433
    %668 = vmatpush1.msra.mxu0 %v432
    %669 = vmatprep.subr.mxu0 %v429
    %670 = vmatpush1.msra.mxu0 %v428
    %671 = vmatprep.subr.mxu0 %v425
    %672 = vmatpush1.msra.mxu0 %v424
    %673 = vmatprep.subr.mxu0 %v421
    %674 = vmatpush1.msra.mxu0 %v420
    %675 = vmatprep.subr.mxu0 %v417
    %676 = vmatpush1.msra.mxu0 %v416
    %677 = vmatprep.subr.mxu0 %v413
    %678 = vmatpush1.msra.mxu0 %v412
    %679 = vmatprep.subr.mxu0 %v409
    %680 = vmatpush1.msra.mxu0 %v408
    %681 = vmatprep.subr.mxu0 0.0
    %682 = vmatpush2.msra.mxu0 0.0
    %683 = vmatprep.subr.mxu0 0.0
    %684 = vmatpush2.msra.mxu0 0.0
    %685 = vmatprep.subr.mxu0 0.0
    %686 = vmatpush2.msra.mxu0 0.0
    %687 = vmatprep.subr.mxu0 0.0
    %688 = vmatpush2.msra.mxu0 0.0
    %689 = vmatprep.subr.mxu0 0.0
    %690 = vmatpush2.msra.mxu0 0.0
    %691 = vmatprep.subr.mxu0 0.0
    %692 = vmatpush2.msra.mxu0 0.0
    %693 = vmatprep.subr.mxu0 0.0
    %694 = vmatpush2.msra.mxu0 0.0
    %695 = vmatprep.subr.mxu0 0.0
    %696 = vmatpush2.msra.mxu0 0.0
    %697 = vmatprep.subr.mxu0 0.0
    %698 = vmatpush2.msra.mxu0 0.0
    %699 = vmatprep.subr.mxu0 0.0
    %700 = vmatpush2.msra.mxu0 0.0
    %701 = vmatprep.subr.mxu0 0.0
    %702 = vmatpush2.msra.mxu0 0.0
    %703 = vmatprep.subr.mxu0 0.0
    %704 = vmatpush2.msra.mxu0 0.0
    %705 = vmatprep.subr.mxu0 0.0
    %706 = vmatpush2.msra.mxu0 0.0
    %707 = vmatprep.subr.mxu0 0.0
    %708 = vmatpush2.msra.mxu0 0.0
    %709 = vmatprep.subr.mxu0 0.0
    %710 = vmatpush2.msra.mxu0 0.0
    %711 = vmatprep.subr.mxu0 0.0
    %712 = vmatpush2.msra.mxu0 0.0
    %713 = vmatprep.mubr.f32.mxu0 0.0
    %714 = vmatmul.mubr.f32.gmra.mxu0 %v641
    %v715 = vpop.f32.mrf.mxu0
    %v716 = vadd.f32 0.0, %v715
    %v717 = vpop.f32.mrf.mxu0
    %v718 = vadd.f32 0.0, %v717
    %719 = vdwg.mxu0
    %720 = vmatprep.subr.mxu0 %v471
    %721 = vmatpush1.msra.mxu0 %v470
    %722 = vmatprep.subr.mxu0 %v467
    %723 = vmatpush1.msra.mxu0 %v466
    %724 = vmatprep.subr.mxu0 %v463
    %725 = vmatpush1.msra.mxu0 %v462
    %726 = vmatprep.subr.mxu0 %v459
    %727 = vmatpush1.msra.mxu0 %v458
    %728 = vmatprep.subr.mxu0 %v455
    %729 = vmatpush1.msra.mxu0 %v454
    %730 = vmatprep.subr.mxu0 %v451
    %731 = vmatpush1.msra.mxu0 %v450
    %732 = vmatprep.subr.mxu0 %v447
    %733 = vmatpush1.msra.mxu0 %v446
    %734 = vmatprep.subr.mxu0 %v443
    %735 = vmatpush1.msra.mxu0 %v442
    %736 = vmatprep.subr.mxu0 %v439
    %737 = vmatpush1.msra.mxu0 %v438
    %738 = vmatprep.subr.mxu0 %v435
    %739 = vmatpush1.msra.mxu0 %v434
    %740 = vmatprep.subr.mxu0 %v431
    %741 = vmatpush1.msra.mxu0 %v430
    %742 = vmatprep.subr.mxu0 %v427
    %743 = vmatpush1.msra.mxu0 %v426
    %744 = vmatprep.subr.mxu0 %v423
    %745 = vmatpush1.msra.mxu0 %v422
    %746 = vmatprep.subr.mxu0 %v419
    %747 = vmatpush1.msra.mxu0 %v418
    %748 = vmatprep.subr.mxu0 %v415
    %749 = vmatpush1.msra.mxu0 %v414
    %750 = vmatprep.subr.mxu0 %v411
    %751 = vmatpush1.msra.mxu0 %v410
    %752 = vmatprep.subr.mxu0 0.0
    %753 = vmatpush2.msra.mxu0 0.0
    %754 = vmatprep.subr.mxu0 0.0
    %755 = vmatpush2.msra.mxu0 0.0
    %756 = vmatprep.subr.mxu0 0.0
    %757 = vmatpush2.msra.mxu0 0.0
    %758 = vmatprep.subr.mxu0 0.0
    %759 = vmatpush2.msra.mxu0 0.0
    %760 = vmatprep.subr.mxu0 0.0
    %761 = vmatpush2.msra.mxu0 0.0
    %762 = vmatprep.subr.mxu0 0.0
    %763 = vmatpush2.msra.mxu0 0.0
    %764 = vmatprep.subr.mxu0 0.0
    %765 = vmatpush2.msra.mxu0 0.0
    %766 = vmatprep.subr.mxu0 0.0
    %767 = vmatpush2.msra.mxu0 0.0
    %768 = vmatprep.subr.mxu0 0.0
    %769 = vmatpush2.msra.mxu0 0.0
    %770 = vmatprep.subr.mxu0 0.0
    %771 = vmatpush2.msra.mxu0 0.0
    %772 = vmatprep.subr.mxu0 0.0
    %773 = vmatpush2.msra.mxu0 0.0
    %774 = vmatprep.subr.mxu0 0.0
    %775 = vmatpush2.msra.mxu0 0.0
    %776 = vmatprep.subr.mxu0 0.0
    %777 = vmatpush2.msra.mxu0 0.0
    %778 = vmatprep.subr.mxu0 0.0
    %779 = vmatpush2.msra.mxu0 0.0
    %780 = vmatprep.subr.mxu0 0.0
    %781 = vmatpush2.msra.mxu0 0.0
    %782 = vmatprep.subr.mxu0 0.0
    %783 = vmatpush2.msra.mxu0 0.0
    %784 = vmatprep.mubr.f32.mxu0 0.0
    %785 = vmatmul.mubr.f32.gmra.mxu0 %v641
    %v786 = vpop.f32.mrf.mxu0
    %v787 = vadd.f32 0.0, %v786
    %v788 = vpop.f32.mrf.mxu0
    %v789 = vadd.f32 0.0, %v788
    %790 = vdwg.mxu0
    %v791 = vadd.f32 %v645, %v716
    %v792 = vadd.f32 %v646, %v718
    %v793 = vadd.f32 %v647, %v787
    %v794 = vadd.f32 %v648, %v789
    %v795 = vxor.u32 %v791, 2147483648
    %v796 = vmul.f32 %v795, 1.442695
    %v797 = vpow.pop %v796
    %v798 = vadd.f32 %v797, 1.0
    %v799 = vrcp.pop %v798
    %v800 = vmul.f32 1.0, %v799
    %v801 = vxor.u32 %v792, 2147483648
    %v802 = vmul.f32 %v801, 1.442695
    %v803 = vpow.pop %v802
    %v804 = vadd.f32 %v803, 1.0
    %v805 = vrcp.pop %v804
    %v806 = vmul.f32 1.0, %v805
    %v807 = vtanh.pop %v793
    %v808 = vxor.u32 %v794, 2147483648
    %v809 = vmul.f32 %v808, 1.442695
    %v810 = vpow.pop %v809
    %v811 = vadd.f32 %v810, 1.0
    %v812 = vrcp.pop %v811
    %v813 = vmul.f32 1.0, %v812
    %v814 = vmul.f32 %v806, %v639
    %v815 = vmul.f32 %v800, %v807
    %v816 = vadd.f32 %v814, %v815
    %v817 = vtanh.pop %v816
    %v818 = vmul.f32 %v813, %v817
    %s819 = smul.u32 2, 4
    %s820 = smul.addr %s819, 8
    %s821 = scalar_lea.vmem [#allocation2], %s820
    %v822 = vld [vmem:[%s821] sm:$0xff]
    %v823 = vld [vmem:[%s821 + $0x8] sm:$0xff]
    %v824 = vld [vmem:[%s821 + $0x10] sm:$0xff]
    %v825 = vld [vmem:[%s821 + $0x18] sm:$0xff]
    %826 = vmatprep.subr.mxu0 %v469
    %827 = vmatpush1.msra.mxu0 %v468
    %828 = vmatprep.subr.mxu0 %v465
    %829 = vmatpush1.msra.mxu0 %v464
    %830 = vmatprep.subr.mxu0 %v461
    %831 = vmatpush1.msra.mxu0 %v460
    %832 = vmatprep.subr.mxu0 %v457
    %833 = vmatpush1.msra.mxu0 %v456
    %834 = vmatprep.subr.mxu0 %v453
    %835 = vmatpush1.msra.mxu0 %v452
    %836 = vmatprep.subr.mxu0 %v449
    %837 = vmatpush1.msra.mxu0 %v448
    %838 = vmatprep.subr.mxu0 %v445
    %839 = vmatpush1.msra.mxu0 %v444
    %840 = vmatprep.subr.mxu0 %v441
    %841 = vmatpush1.msra.mxu0 %v440
    %842 = vmatprep.subr.mxu0 %v437
    %843 = vmatpush1.msra.mxu0 %v436
    %844 = vmatprep.subr.mxu0 %v433
    %845 = vmatpush1.msra.mxu0 %v432
    %846 = vmatprep.subr.mxu0 %v429
    %847 = vmatpush1.msra.mxu0 %v428
    %848 = vmatprep.subr.mxu0 %v425
    %849 = vmatpush1.msra.mxu0 %v424
    %850 = vmatprep.subr.mxu0 %v421
    %851 = vmatpush1.msra.mxu0 %v420
    %852 = vmatprep.subr.mxu0 %v417
    %853 = vmatpush1.msra.mxu0 %v416
    %854 = vmatprep.subr.mxu0 %v413
    %855 = vmatpush1.msra.mxu0 %v412
    %856 = vmatprep.subr.mxu0 %v409
    %857 = vmatpush1.msra.mxu0 %v408
    %858 = vmatprep.subr.mxu0 0.0
    %859 = vmatpush2.msra.mxu0 0.0
    %860 = vmatprep.subr.mxu0 0.0
    %861 = vmatpush2.msra.mxu0 0.0
    %862 = vmatprep.subr.mxu0 0.0
    %863 = vmatpush2.msra.mxu0 0.0
    %864 = vmatprep.subr.mxu0 0.0
    %865 = vmatpush2.msra.mxu0 0.0
    %866 = vmatprep.subr.mxu0 0.0
    %867 = vmatpush2.msra.mxu0 0.0
    %868 = vmatprep.subr.mxu0 0.0
    %869 = vmatpush2.msra.mxu0 0.0
    %870 = vmatprep.subr.mxu0 0.0
    %871 = vmatpush2.msra.mxu0 0.0
    %872 = vmatprep.subr.mxu0 0.0
    %873 = vmatpush2.msra.mxu0 0.0
    %874 = vmatprep.subr.mxu0 0.0
    %875 = vmatpush2.msra.mxu0 0.0
    %876 = vmatprep.subr.mxu0 0.0
    %877 = vmatpush2.msra.mxu0 0.0
    %878 = vmatprep.subr.mxu0 0.0
    %879 = vmatpush2.msra.mxu0 0.0
    %880 = vmatprep.subr.mxu0 0.0
    %881 = vmatpush2.msra.mxu0 0.0
    %882 = vmatprep.subr.mxu0 0.0
    %883 = vmatpush2.msra.mxu0 0.0
    %884 = vmatprep.subr.mxu0 0.0
    %885 = vmatpush2.msra.mxu0 0.0
    %886 = vmatprep.subr.mxu0 0.0
    %887 = vmatpush2.msra.mxu0 0.0
    %888 = vmatprep.subr.mxu0 0.0
    %889 = vmatpush2.msra.mxu0 0.0
    %890 = vmatprep.mubr.f32.mxu0 0.0
    %891 = vmatmul.mubr.f32.gmra.mxu0 %v818
    %v892 = vpop.f32.mrf.mxu0
    %v893 = vadd.f32 0.0, %v892
    %v894 = vpop.f32.mrf.mxu0
    %v895 = vadd.f32 0.0, %v894
    %896 = vdwg.mxu0
    %897 = vmatprep.subr.mxu0 %v471
    %898 = vmatpush1.msra.mxu0 %v470
    %899 = vmatprep.subr.mxu0 %v467
    %900 = vmatpush1.msra.mxu0 %v466
    %901 = vmatprep.subr.mxu0 %v463
    %902 = vmatpush1.msra.mxu0 %v462
    %903 = vmatprep.subr.mxu0 %v459
    %904 = vmatpush1.msra.mxu0 %v458
    %905 = vmatprep.subr.mxu0 %v455
    %906 = vmatpush1.msra.mxu0 %v454
    %907 = vmatprep.subr.mxu0 %v451
    %908 = vmatpush1.msra.mxu0 %v450
    %909 = vmatprep.subr.mxu0 %v447
    %910 = vmatpush1.msra.mxu0 %v446
    %911 = vmatprep.subr.mxu0 %v443
    %912 = vmatpush1.msra.mxu0 %v442
    %913 = vmatprep.subr.mxu0 %v439
    %914 = vmatpush1.msra.mxu0 %v438
    %915 = vmatprep.subr.mxu0 %v435
    %916 = vmatpush1.msra.mxu0 %v434
    %917 = vmatprep.subr.mxu0 %v431
    %918 = vmatpush1.msra.mxu0 %v430
    %919 = vmatprep.subr.mxu0 %v427
    %920 = vmatpush1.msra.mxu0 %v426
    %921 = vmatprep.subr.mxu0 %v423
    %922 = vmatpush1.msra.mxu0 %v422
    %923 = vmatprep.subr.mxu0 %v419
    %924 = vmatpush1.msra.mxu0 %v418
    %925 = vmatprep.subr.mxu0 %v415
    %926 = vmatpush1.msra.mxu0 %v414
    %927 = vmatprep.subr.mxu0 %v411
    %928 = vmatpush1.msra.mxu0 %v410
    %929 = vmatprep.subr.mxu0 0.0
    %930 = vmatpush2.msra.mxu0 0.0
    %931 = vmatprep.subr.mxu0 0.0
    %932 = vmatpush2.msra.mxu0 0.0
    %933 = vmatprep.subr.mxu0 0.0
    %934 = vmatpush2.msra.mxu0 0.0
    %935 = vmatprep.subr.mxu0 0.0
    %936 = vmatpush2.msra.mxu0 0.0
    %937 = vmatprep.subr.mxu0 0.0
    %938 = vmatpush2.msra.mxu0 0.0
    %939 = vmatprep.subr.mxu0 0.0
    %940 = vmatpush2.msra.mxu0 0.0
    %941 = vmatprep.subr.mxu0 0.0
    %942 = vmatpush2.msra.mxu0 0.0
    %943 = vmatprep.subr.mxu0 0.0
    %944 = vmatpush2.msra.mxu0 0.0
    %945 = vmatprep.subr.mxu0 0.0
    %946 = vmatpush2.msra.mxu0 0.0
    %947 = vmatprep.subr.mxu0 0.0
    %948 = vmatpush2.msra.mxu0 0.0
    %949 = vmatprep.subr.mxu0 0.0
    %950 = vmatpush2.msra.mxu0 0.0
    %951 = vmatprep.subr.mxu0 0.0
    %952 = vmatpush2.msra.mxu0 0.0
    %953 = vmatprep.subr.mxu0 0.0
    %954 = vmatpush2.msra.mxu0 0.0
    %955 = vmatprep.subr.mxu0 0.0
    %956 = vmatpush2.msra.mxu0 0.0
    %957 = vmatprep.subr.mxu0 0.0
    %958 = vmatpush2.msra.mxu0 0.0
    %959 = vmatprep.subr.mxu0 0.0
    %960 = vmatpush2.msra.mxu0 0.0
    %961 = vmatprep.mubr.f32.mxu0 0.0
    %962 = vmatmul.mubr.f32.gmra.mxu0 %v818
    %v963 = vpop.f32.mrf.mxu0
    %v964 = vadd.f32 0.0, %v963
    %v965 = vpop.f32.mrf.mxu0
    %v966 = vadd.f32 0.0, %v965
    %967 = vdwg.mxu0
    %v968 = vadd.f32 %v822, %v893
    %v969 = vadd.f32 %v823, %v895
    %v970 = vadd.f32 %v824, %v964
    %v971 = vadd.f32 %v825, %v966
    %v972 = vxor.u32 %v968, 2147483648
    %v973 = vmul.f32 %v972, 1.442695
    %v974 = vpow.pop %v973
    %v975 = vadd.f32 %v974, 1.0
    %v976 = vrcp.pop %v975
    %v977 = vmul.f32 1.0, %v976
    %v978 = vxor.u32 %v969, 2147483648
    %v979 = vmul.f32 %v978, 1.442695
    %v980 = vpow.pop %v979
    %v981 = vadd.f32 %v980, 1.0
    %v982 = vrcp.pop %v981
    %v983 = vmul.f32 1.0, %v982
    %v984 = vtanh.pop %v970
    %v985 = vxor.u32 %v971, 2147483648
    %v986 = vmul.f32 %v985, 1.442695
    %v987 = vpow.pop %v986
    %v988 = vadd.f32 %v987, 1.0
    %v989 = vrcp.pop %v988
    %v990 = vmul.f32 1.0, %v989
    %v991 = vmul.f32 %v983, %v816
    %v992 = vmul.f32 %v977, %v984
    %v993 = vadd.f32 %v991, %v992
    %v994 = vtanh.pop %v993
    %v995 = vmul.f32 %v990, %v994
    %s996 = smul.u32 3, 4
    %s997 = smul.addr %s996, 8
    %s998 = scalar_lea.vmem [#allocation2], %s997
    %v999 = vld [vmem:[%s998] sm:$0xff]
    %v1000 = vld [vmem:[%s998 + $0x8] sm:$0xff]
    %v1001 = vld [vmem:[%s998 + $0x10] sm:$0xff]
    %v1002 = vld [vmem:[%s998 + $0x18] sm:$0xff]
    %1003 = vmatprep.subr.mxu0 %v469
    %1004 = vmatpush1.msra.mxu0 %v468
    %1005 = vmatprep.subr.mxu0 %v465
    %1006 = vmatpush1.msra.mxu0 %v464
    %1007 = vmatprep.subr.mxu0 %v461
    %1008 = vmatpush1.msra.mxu0 %v460
    %1009 = vmatprep.subr.mxu0 %v457
    %1010 = vmatpush1.msra.mxu0 %v456
    %1011 = vmatprep.subr.mxu0 %v453
    %1012 = vmatpush1.msra.mxu0 %v452
    %1013 = vmatprep.subr.mxu0 %v449
    %1014 = vmatpush1.msra.mxu0 %v448
    %1015 = vmatprep.subr.mxu0 %v445
    %1016 = vmatpush1.msra.mxu0 %v444
    %1017 = vmatprep.subr.mxu0 %v441
    %1018 = vmatpush1.msra.mxu0 %v440
    %1019 = vmatprep.subr.mxu0 %v437
    %1020 = vmatpush1.msra.mxu0 %v436
    %1021 = vmatprep.subr.mxu0 %v433
    %1022 = vmatpush1.msra.mxu0 %v432
    %1023 = vmatprep.subr.mxu0 %v429
    %1024 = vmatpush1.msra.mxu0 %v428
    %1025 = vmatprep.subr.mxu0 %v425
    %1026 = vmatpush1.msra.mxu0 %v424
    %1027 = vmatprep.subr.mxu0 %v421
    %1028 = vmatpush1.msra.mxu0 %v420
    %1029 = vmatprep.subr.mxu0 %v417
    %1030 = vmatpush1.msra.mxu0 %v416
    %1031 = vmatprep.subr.mxu0 %v413
    %1032 = vmatpush1.msra.mxu0 %v412
    %1033 = vmatprep.subr.mxu0 %v409
    %1034 = vmatpush1.msra.mxu0 %v408
    %1035 = vmatprep.subr.mxu0 0.0
    %1036 = vmatpush2.msra.mxu0 0.0
    %1037 = vmatprep.subr.mxu0 0.0
    %1038 = vmatpush2.msra.mxu0 0.0
    %1039 = vmatprep.subr.mxu0 0.0
    %1040 = vmatpush2.msra.mxu0 0.0
    %1041 = vmatprep.subr.mxu0 0.0
    %1042 = vmatpush2.msra.mxu0 0.0
    %1043 = vmatprep.subr.mxu0 0.0
    %1044 = vmatpush2.msra.mxu0 0.0
    %1045 = vmatprep.subr.mxu0 0.0
    %1046 = vmatpush2.msra.mxu0 0.0
    %1047 = vmatprep.subr.mxu0 0.0
    %1048 = vmatpush2.msra.mxu0 0.0
    %1049 = vmatprep.subr.mxu0 0.0
    %1050 = vmatpush2.msra.mxu0 0.0
    %1051 = vmatprep.subr.mxu0 0.0
    %1052 = vmatpush2.msra.mxu0 0.0
    %1053 = vmatprep.subr.mxu0 0.0
    %1054 = vmatpush2.msra.mxu0 0.0
    %1055 = vmatprep.subr.mxu0 0.0
    %1056 = vmatpush2.msra.mxu0 0.0
    %1057 = vmatprep.subr.mxu0 0.0
    %1058 = vmatpush2.msra.mxu0 0.0
    %1059 = vmatprep.subr.mxu0 0.0
    %1060 = vmatpush2.msra.mxu0 0.0
    %1061 = vmatprep.subr.mxu0 0.0
    %1062 = vmatpush2.msra.mxu0 0.0
    %1063 = vmatprep.subr.mxu0 0.0
    %1064 = vmatpush2.msra.mxu0 0.0
    %1065 = vmatprep.subr.mxu0 0.0
    %1066 = vmatpush2.msra.mxu0 0.0
    %1067 = vmatprep.mubr.f32.mxu0 0.0
    %1068 = vmatmul.mubr.f32.gmra.mxu0 %v995
    %v1069 = vpop.f32.mrf.mxu0
    %v1070 = vadd.f32 0.0, %v1069
    %v1071 = vpop.f32.mrf.mxu0
    %v1072 = vadd.f32 0.0, %v1071
    %1073 = vdwg.mxu0
    %1074 = vmatprep.subr.mxu0 %v471
    %1075 = vmatpush1.msra.mxu0 %v470
    %1076 = vmatprep.subr.mxu0 %v467
    %1077 = vmatpush1.msra.mxu0 %v466
    %1078 = vmatprep.subr.mxu0 %v463
    %1079 = vmatpush1.msra.mxu0 %v462
    %1080 = vmatprep.subr.mxu0 %v459
    %1081 = vmatpush1.msra.mxu0 %v458
    %1082 = vmatprep.subr.mxu0 %v455
    %1083 = vmatpush1.msra.mxu0 %v454
    %1084 = vmatprep.subr.mxu0 %v451
    %1085 = vmatpush1.msra.mxu0 %v450
    %1086 = vmatprep.subr.mxu0 %v447
    %1087 = vmatpush1.msra.mxu0 %v446
    %1088 = vmatprep.subr.mxu0 %v443
    %1089 = vmatpush1.msra.mxu0 %v442
    %1090 = vmatprep.subr.mxu0 %v439
    %1091 = vmatpush1.msra.mxu0 %v438
    %1092 = vmatprep.subr.mxu0 %v435
    %1093 = vmatpush1.msra.mxu0 %v434
    %1094 = vmatprep.subr.mxu0 %v431
    %1095 = vmatpush1.msra.mxu0 %v430
    %1096 = vmatprep.subr.mxu0 %v427
    %1097 = vmatpush1.msra.mxu0 %v426
    %1098 = vmatprep.subr.mxu0 %v423
    %1099 = vmatpush1.msra.mxu0 %v422
    %1100 = vmatprep.subr.mxu0 %v419
    %1101 = vmatpush1.msra.mxu0 %v418
    %1102 = vmatprep.subr.mxu0 %v415
    %1103 = vmatpush1.msra.mxu0 %v414
    %1104 = vmatprep.subr.mxu0 %v411
    %1105 = vmatpush1.msra.mxu0 %v410
    %1106 = vmatprep.subr.mxu0 0.0
    %1107 = vmatpush2.msra.mxu0 0.0
    %1108 = vmatprep.subr.mxu0 0.0
    %1109 = vmatpush2.msra.mxu0 0.0
    %1110 = vmatprep.subr.mxu0 0.0
    %1111 = vmatpush2.msra.mxu0 0.0
    %1112 = vmatprep.subr.mxu0 0.0
    %1113 = vmatpush2.msra.mxu0 0.0
    %1114 = vmatprep.subr.mxu0 0.0
    %1115 = vmatpush2.msra.mxu0 0.0
    %1116 = vmatprep.subr.mxu0 0.0
    %1117 = vmatpush2.msra.mxu0 0.0
    %1118 = vmatprep.subr.mxu0 0.0
    %1119 = vmatpush2.msra.mxu0 0.0
    %1120 = vmatprep.subr.mxu0 0.0
    %1121 = vmatpush2.msra.mxu0 0.0
    %1122 = vmatprep.subr.mxu0 0.0
    %1123 = vmatpush2.msra.mxu0 0.0
    %1124 = vmatprep.subr.mxu0 0.0
    %1125 = vmatpush2.msra.mxu0 0.0
    %1126 = vmatprep.subr.mxu0 0.0
    %1127 = vmatpush2.msra.mxu0 0.0
    %1128 = vmatprep.subr.mxu0 0.0
    %1129 = vmatpush2.msra.mxu0 0.0
    %1130 = vmatprep.subr.mxu0 0.0
    %1131 = vmatpush2.msra.mxu0 0.0
    %1132 = vmatprep.subr.mxu0 0.0
    %1133 = vmatpush2.msra.mxu0 0.0
    %1134 = vmatprep.subr.mxu0 0.0
    %1135 = vmatpush2.msra.mxu0 0.0
    %1136 = vmatprep.subr.mxu0 0.0
    %1137 = vmatpush2.msra.mxu0 0.0
    %1138 = vmatprep.mubr.f32.mxu0 0.0
    %1139 = vmatmul.mubr.f32.gmra.mxu0 %v995
    %v1140 = vpop.f32.mrf.mxu0
    %v1141 = vadd.f32 0.0, %v1140
    %v1142 = vpop.f32.mrf.mxu0
    %v1143 = vadd.f32 0.0, %v1142
    %1144 = vdwg.mxu0
    %v1145 = vadd.f32 %v999, %v1070
    %v1146 = vadd.f32 %v1000, %v1072
    %v1147 = vadd.f32 %v1001, %v1141
    %v1148 = vadd.f32 %v1002, %v1143
    %v1149 = vxor.u32 %v1145, 2147483648
    %v1150 = vmul.f32 %v1149, 1.442695
    %v1151 = vpow.pop %v1150
    %v1152 = vadd.f32 %v1151, 1.0
    %v1153 = vrcp.pop %v1152
    %v1154 = vmul.f32 1.0, %v1153
    %v1155 = vxor.u32 %v1146, 2147483648
    %v1156 = vmul.f32 %v1155, 1.442695
    %v1157 = vpow.pop %v1156
    %v1158 = vadd.f32 %v1157, 1.0
    %v1159 = vrcp.pop %v1158
    %v1160 = vmul.f32 1.0, %v1159
    %v1161 = vtanh.pop %v1147
    %v1162 = vxor.u32 %v1148, 2147483648
    %v1163 = vmul.f32 %v1162, 1.442695
    %v1164 = vpow.pop %v1163
    %v1165 = vadd.f32 %v1164, 1.0
    %v1166 = vrcp.pop %v1165
    %v1167 = vmul.f32 1.0, %v1166
    %v1168 = vmul.f32 %v1160, %v993
    %v1169 = vmul.f32 %v1154, %v1161
    %v1170 = vadd.f32 %v1168, %v1169
    %v1171 = vtanh.pop %v1170
    %v1172 = vmul.f32 %v1167, %v1171
    %s1173 = smul.u32 4, 4
    %s1174 = smul.addr %s1173, 8
    %s1175 = scalar_lea.vmem [#allocation2], %s1174
    %v1176 = vld [vmem:[%s1175] sm:$0xff]
    %v1177 = vld [vmem:[%s1175 + $0x8] sm:$0xff]
    %v1178 = vld [vmem:[%s1175 + $0x10] sm:$0xff]
    %v1179 = vld [vmem:[%s1175 + $0x18] sm:$0xff]
    %1180 = vmatprep.subr.mxu0 %v469
    %1181 = vmatpush1.msra.mxu0 %v468
    %1182 = vmatprep.subr.mxu0 %v465
    %1183 = vmatpush1.msra.mxu0 %v464
    %1184 = vmatprep.subr.mxu0 %v461
    %1185 = vmatpush1.msra.mxu0 %v460
    %1186 = vmatprep.subr.mxu0 %v457
    %1187 = vmatpush1.msra.mxu0 %v456
    %1188 = vmatprep.subr.mxu0 %v453
    %1189 = vmatpush1.msra.mxu0 %v452
    %1190 = vmatprep.subr.mxu0 %v449
    %1191 = vmatpush1.msra.mxu0 %v448
    %1192 = vmatprep.subr.mxu0 %v445
    %1193 = vmatpush1.msra.mxu0 %v444
    %1194 = vmatprep.subr.mxu0 %v441
    %1195 = vmatpush1.msra.mxu0 %v440
    %1196 = vmatprep.subr.mxu0 %v437
    %1197 = vmatpush1.msra.mxu0 %v436
    %1198 = vmatprep.subr.mxu0 %v433
    %1199 = vmatpush1.msra.mxu0 %v432
    %1200 = vmatprep.subr.mxu0 %v429
    %1201 = vmatpush1.msra.mxu0 %v428
    %1202 = vmatprep.subr.mxu0 %v425
    %1203 = vmatpush1.msra.mxu0 %v424
    %1204 = vmatprep.subr.mxu0 %v421
    %1205 = vmatpush1.msra.mxu0 %v420
    %1206 = vmatprep.subr.mxu0 %v417
    %1207 = vmatpush1.msra.mxu0 %v416
    %1208 = vmatprep.subr.mxu0 %v413
    %1209 = vmatpush1.msra.mxu0 %v412
    %1210 = vmatprep.subr.mxu0 %v409
    %1211 = vmatpush1.msra.mxu0 %v408
    %1212 = vmatprep.subr.mxu0 0.0
    %1213 = vmatpush2.msra.mxu0 0.0
    %1214 = vmatprep.subr.mxu0 0.0
    %1215 = vmatpush2.msra.mxu0 0.0
    %1216 = vmatprep.subr.mxu0 0.0
    %1217 = vmatpush2.msra.mxu0 0.0
    %1218 = vmatprep.subr.mxu0 0.0
    %1219 = vmatpush2.msra.mxu0 0.0
    %1220 = vmatprep.subr.mxu0 0.0
    %1221 = vmatpush2.msra.mxu0 0.0
    %1222 = vmatprep.subr.mxu0 0.0
    %1223 = vmatpush2.msra.mxu0 0.0
    %1224 = vmatprep.subr.mxu0 0.0
    %1225 = vmatpush2.msra.mxu0 0.0
    %1226 = vmatprep.subr.mxu0 0.0
    %1227 = vmatpush2.msra.mxu0 0.0
    %1228 = vmatprep.subr.mxu0 0.0
    %1229 = vmatpush2.msra.mxu0 0.0
    %1230 = vmatprep.subr.mxu0 0.0
    %1231 = vmatpush2.msra.mxu0 0.0
    %1232 = vmatprep.subr.mxu0 0.0
    %1233 = vmatpush2.msra.mxu0 0.0
    %1234 = vmatprep.subr.mxu0 0.0
    %1235 = vmatpush2.msra.mxu0 0.0
    %1236 = vmatprep.subr.mxu0 0.0
    %1237 = vmatpush2.msra.mxu0 0.0
    %1238 = vmatprep.subr.mxu0 0.0
    %1239 = vmatpush2.msra.mxu0 0.0
    %1240 = vmatprep.subr.mxu0 0.0
    %1241 = vmatpush2.msra.mxu0 0.0
    %1242 = vmatprep.subr.mxu0 0.0
    %1243 = vmatpush2.msra.mxu0 0.0
    %1244 = vmatprep.mubr.f32.mxu0 0.0
    %1245 = vmatmul.mubr.f32.gmra.mxu0 %v1172
    %v1246 = vpop.f32.mrf.mxu0
    %v1247 = vadd.f32 0.0, %v1246
    %v1248 = vpop.f32.mrf.mxu0
    %v1249 = vadd.f32 0.0, %v1248
    %1250 = vdwg.mxu0
    %1251 = vmatprep.subr.mxu0 %v471
    %1252 = vmatpush1.msra.mxu0 %v470
    %1253 = vmatprep.subr.mxu0 %v467
    %1254 = vmatpush1.msra.mxu0 %v466
    %1255 = vmatprep.subr.mxu0 %v463
    %1256 = vmatpush1.msra.mxu0 %v462
    %1257 = vmatprep.subr.mxu0 %v459
    %1258 = vmatpush1.msra.mxu0 %v458
    %1259 = vmatprep.subr.mxu0 %v455
    %1260 = vmatpush1.msra.mxu0 %v454
    %1261 = vmatprep.subr.mxu0 %v451
    %1262 = vmatpush1.msra.mxu0 %v450
    %1263 = vmatprep.subr.mxu0 %v447
    %1264 = vmatpush1.msra.mxu0 %v446
    %1265 = vmatprep.subr.mxu0 %v443
    %1266 = vmatpush1.msra.mxu0 %v442
    %1267 = vmatprep.subr.mxu0 %v439
    %1268 = vmatpush1.msra.mxu0 %v438
    %1269 = vmatprep.subr.mxu0 %v435
    %1270 = vmatpush1.msra.mxu0 %v434
    %1271 = vmatprep.subr.mxu0 %v431
    %1272 = vmatpush1.msra.mxu0 %v430
    %1273 = vmatprep.subr.mxu0 %v427
    %1274 = vmatpush1.msra.mxu0 %v426
    %1275 = vmatprep.subr.mxu0 %v423
    %1276 = vmatpush1.msra.mxu0 %v422
    %1277 = vmatprep.subr.mxu0 %v419
    %1278 = vmatpush1.msra.mxu0 %v418
    %1279 = vmatprep.subr.mxu0 %v415
    %1280 = vmatpush1.msra.mxu0 %v414
    %1281 = vmatprep.subr.mxu0 %v411
    %1282 = vmatpush1.msra.mxu0 %v410
    %1283 = vmatprep.subr.mxu0 0.0
    %1284 = vmatpush2.msra.mxu0 0.0
    %1285 = vmatprep.subr.mxu0 0.0
    %1286 = vmatpush2.msra.mxu0 0.0
    %1287 = vmatprep.subr.mxu0 0.0
    %1288 = vmatpush2.msra.mxu0 0.0
    %1289 = vmatprep.subr.mxu0 0.0
    %1290 = vmatpush2.msra.mxu0 0.0
    %1291 = vmatprep.subr.mxu0 0.0
    %1292 = vmatpush2.msra.mxu0 0.0
    %1293 = vmatprep.subr.mxu0 0.0
    %1294 = vmatpush2.msra.mxu0 0.0
    %1295 = vmatprep.subr.mxu0 0.0
    %1296 = vmatpush2.msra.mxu0 0.0
    %1297 = vmatprep.subr.mxu0 0.0
    %1298 = vmatpush2.msra.mxu0 0.0
    %1299 = vmatprep.subr.mxu0 0.0
    %1300 = vmatpush2.msra.mxu0 0.0
    %1301 = vmatprep.subr.mxu0 0.0
    %1302 = vmatpush2.msra.mxu0 0.0
    %1303 = vmatprep.subr.mxu0 0.0
    %1304 = vmatpush2.msra.mxu0 0.0
    %1305 = vmatprep.subr.mxu0 0.0
    %1306 = vmatpush2.msra.mxu0 0.0
    %1307 = vmatprep.subr.mxu0 0.0
    %1308 = vmatpush2.msra.mxu0 0.0
    %1309 = vmatprep.subr.mxu0 0.0
    %1310 = vmatpush2.msra.mxu0 0.0
    %1311 = vmatprep.subr.mxu0 0.0
    %1312 = vmatpush2.msra.mxu0 0.0
    %1313 = vmatprep.subr.mxu0 0.0
    %1314 = vmatpush2.msra.mxu0 0.0
    %1315 = vmatprep.mubr.f32.mxu0 0.0
    %1316 = vmatmul.mubr.f32.gmra.mxu0 %v1172
    %v1317 = vpop.f32.mrf.mxu0
    %v1318 = vadd.f32 0.0, %v1317
    %v1319 = vpop.f32.mrf.mxu0
    %v1320 = vadd.f32 0.0, %v1319
    %1321 = vdwg.mxu0
    %v1322 = vadd.f32 %v1176, %v1247
    %v1323 = vadd.f32 %v1177, %v1249
    %v1324 = vadd.f32 %v1178, %v1318
    %v1325 = vadd.f32 %v1179, %v1320
    %v1326 = vxor.u32 %v1322, 2147483648
    %v1327 = vmul.f32 %v1326, 1.442695
    %v1328 = vpow.pop %v1327
    %v1329 = vadd.f32 %v1328, 1.0
    %v1330 = vrcp.pop %v1329
    %v1331 = vmul.f32 1.0, %v1330
    %v1332 = vxor.u32 %v1323, 2147483648
    %v1333 = vmul.f32 %v1332, 1.442695
    %v1334 = vpow.pop %v1333
    %v1335 = vadd.f32 %v1334, 1.0
    %v1336 = vrcp.pop %v1335
    %v1337 = vmul.f32 1.0, %v1336
    %v1338 = vtanh.pop %v1324
    %v1339 = vxor.u32 %v1325, 2147483648
    %v1340 = vmul.f32 %v1339, 1.442695
    %v1341 = vpow.pop %v1340
    %v1342 = vadd.f32 %v1341, 1.0
    %v1343 = vrcp.pop %v1342
    %v1344 = vmul.f32 1.0, %v1343
    %v1345 = vmul.f32 %v1337, %v1170
    %v1346 = vmul.f32 %v1331, %v1338
    %v1347 = vadd.f32 %v1345, %v1346
    %v1348 = vtanh.pop %v1347
    %v1349 = vmul.f32 %v1344, %v1348
    %s1350 = smul.u32 5, 4
    %s1351 = smul.addr %s1350, 8
    %s1352 = scalar_lea.vmem [#allocation2], %s1351
    %v1353 = vld [vmem:[%s1352] sm:$0xff]
    %v1354 = vld [vmem:[%s1352 + $0x8] sm:$0xff]
    %v1355 = vld [vmem:[%s1352 + $0x10] sm:$0xff]
    %v1356 = vld [vmem:[%s1352 + $0x18] sm:$0xff]
    %1357 = vmatprep.subr.mxu0 %v469
    %1358 = vmatpush1.msra.mxu0 %v468
    %1359 = vmatprep.subr.mxu0 %v465
    %1360 = vmatpush1.msra.mxu0 %v464
    %1361 = vmatprep.subr.mxu0 %v461
    %1362 = vmatpush1.msra.mxu0 %v460
    %1363 = vmatprep.subr.mxu0 %v457
    %1364 = vmatpush1.msra.mxu0 %v456
    %1365 = vmatprep.subr.mxu0 %v453
    %1366 = vmatpush1.msra.mxu0 %v452
    %1367 = vmatprep.subr.mxu0 %v449
    %1368 = vmatpush1.msra.mxu0 %v448
    %1369 = vmatprep.subr.mxu0 %v445
    %1370 = vmatpush1.msra.mxu0 %v444
    %1371 = vmatprep.subr.mxu0 %v441
    %1372 = vmatpush1.msra.mxu0 %v440
    %1373 = vmatprep.subr.mxu0 %v437
    %1374 = vmatpush1.msra.mxu0 %v436
    %1375 = vmatprep.subr.mxu0 %v433
    %1376 = vmatpush1.msra.mxu0 %v432
    %1377 = vmatprep.subr.mxu0 %v429
    %1378 = vmatpush1.msra.mxu0 %v428
    %1379 = vmatprep.subr.mxu0 %v425
    %1380 = vmatpush1.msra.mxu0 %v424
    %1381 = vmatprep.subr.mxu0 %v421
    %1382 = vmatpush1.msra.mxu0 %v420
    %1383 = vmatprep.subr.mxu0 %v417
    %1384 = vmatpush1.msra.mxu0 %v416
    %1385 = vmatprep.subr.mxu0 %v413
    %1386 = vmatpush1.msra.mxu0 %v412
    %1387 = vmatprep.subr.mxu0 %v409
    %1388 = vmatpush1.msra.mxu0 %v408
    %1389 = vmatprep.subr.mxu0 0.0
    %1390 = vmatpush2.msra.mxu0 0.0
    %1391 = vmatprep.subr.mxu0 0.0
    %1392 = vmatpush2.msra.mxu0 0.0
    %1393 = vmatprep.subr.mxu0 0.0
    %1394 = vmatpush2.msra.mxu0 0.0
    %1395 = vmatprep.subr.mxu0 0.0
    %1396 = vmatpush2.msra.mxu0 0.0
    %1397 = vmatprep.subr.mxu0 0.0
    %1398 = vmatpush2.msra.mxu0 0.0
    %1399 = vmatprep.subr.mxu0 0.0
    %1400 = vmatpush2.msra.mxu0 0.0
    %1401 = vmatprep.subr.mxu0 0.0
    %1402 = vmatpush2.msra.mxu0 0.0
    %1403 = vmatprep.subr.mxu0 0.0
    %1404 = vmatpush2.msra.mxu0 0.0
    %1405 = vmatprep.subr.mxu0 0.0
    %1406 = vmatpush2.msra.mxu0 0.0
    %1407 = vmatprep.subr.mxu0 0.0
    %1408 = vmatpush2.msra.mxu0 0.0
    %1409 = vmatprep.subr.mxu0 0.0
    %1410 = vmatpush2.msra.mxu0 0.0
    %1411 = vmatprep.subr.mxu0 0.0
    %1412 = vmatpush2.msra.mxu0 0.0
    %1413 = vmatprep.subr.mxu0 0.0
    %1414 = vmatpush2.msra.mxu0 0.0
    %1415 = vmatprep.subr.mxu0 0.0
    %1416 = vmatpush2.msra.mxu0 0.0
    %1417 = vmatprep.subr.mxu0 0.0
    %1418 = vmatpush2.msra.mxu0 0.0
    %1419 = vmatprep.subr.mxu0 0.0
    %1420 = vmatpush2.msra.mxu0 0.0
    %1421 = vmatprep.mubr.f32.mxu0 0.0
    %1422 = vmatmul.mubr.f32.gmra.mxu0 %v1349
    %v1423 = vpop.f32.mrf.mxu0
    %v1424 = vadd.f32 0.0, %v1423
    %v1425 = vpop.f32.mrf.mxu0
    %v1426 = vadd.f32 0.0, %v1425
    %1427 = vdwg.mxu0
    %1428 = vmatprep.subr.mxu0 %v471
    %1429 = vmatpush1.msra.mxu0 %v470
    %1430 = vmatprep.subr.mxu0 %v467
    %1431 = vmatpush1.msra.mxu0 %v466
    %1432 = vmatprep.subr.mxu0 %v463
    %1433 = vmatpush1.msra.mxu0 %v462
    %1434 = vmatprep.subr.mxu0 %v459
    %1435 = vmatpush1.msra.mxu0 %v458
    %1436 = vmatprep.subr.mxu0 %v455
    %1437 = vmatpush1.msra.mxu0 %v454
    %1438 = vmatprep.subr.mxu0 %v451
    %1439 = vmatpush1.msra.mxu0 %v450
    %1440 = vmatprep.subr.mxu0 %v447
    %1441 = vmatpush1.msra.mxu0 %v446
    %1442 = vmatprep.subr.mxu0 %v443
    %1443 = vmatpush1.msra.mxu0 %v442
    %1444 = vmatprep.subr.mxu0 %v439
    %1445 = vmatpush1.msra.mxu0 %v438
    %1446 = vmatprep.subr.mxu0 %v435
    %1447 = vmatpush1.msra.mxu0 %v434
    %1448 = vmatprep.subr.mxu0 %v431
    %1449 = vmatpush1.msra.mxu0 %v430
    %1450 = vmatprep.subr.mxu0 %v427
    %1451 = vmatpush1.msra.mxu0 %v426
    %1452 = vmatprep.subr.mxu0 %v423
    %1453 = vmatpush1.msra.mxu0 %v422
    %1454 = vmatprep.subr.mxu0 %v419
    %1455 = vmatpush1.msra.mxu0 %v418
    %1456 = vmatprep.subr.mxu0 %v415
    %1457 = vmatpush1.msra.mxu0 %v414
    %1458 = vmatprep.subr.mxu0 %v411
    %1459 = vmatpush1.msra.mxu0 %v410
    %1460 = vmatprep.subr.mxu0 0.0
    %1461 = vmatpush2.msra.mxu0 0.0
    %1462 = vmatprep.subr.mxu0 0.0
    %1463 = vmatpush2.msra.mxu0 0.0
    %1464 = vmatprep.subr.mxu0 0.0
    %1465 = vmatpush2.msra.mxu0 0.0
    %1466 = vmatprep.subr.mxu0 0.0
    %1467 = vmatpush2.msra.mxu0 0.0
    %1468 = vmatprep.subr.mxu0 0.0
    %1469 = vmatpush2.msra.mxu0 0.0
    %1470 = vmatprep.subr.mxu0 0.0
    %1471 = vmatpush2.msra.mxu0 0.0
    %1472 = vmatprep.subr.mxu0 0.0
    %1473 = vmatpush2.msra.mxu0 0.0
    %1474 = vmatprep.subr.mxu0 0.0
    %1475 = vmatpush2.msra.mxu0 0.0
    %1476 = vmatprep.subr.mxu0 0.0
    %1477 = vmatpush2.msra.mxu0 0.0
    %1478 = vmatprep.subr.mxu0 0.0
    %1479 = vmatpush2.msra.mxu0 0.0
    %1480 = vmatprep.subr.mxu0 0.0
    %1481 = vmatpush2.msra.mxu0 0.0
    %1482 = vmatprep.subr.mxu0 0.0
    %1483 = vmatpush2.msra.mxu0 0.0
    %1484 = vmatprep.subr.mxu0 0.0
    %1485 = vmatpush2.msra.mxu0 0.0
    %1486 = vmatprep.subr.mxu0 0.0
    %1487 = vmatpush2.msra.mxu0 0.0
    %1488 = vmatprep.subr.mxu0 0.0
    %1489 = vmatpush2.msra.mxu0 0.0
    %1490 = vmatprep.subr.mxu0 0.0
    %1491 = vmatpush2.msra.mxu0 0.0
    %1492 = vmatprep.mubr.f32.mxu0 0.0
    %1493 = vmatmul.mubr.f32.gmra.mxu0 %v1349
    %v1494 = vpop.f32.mrf.mxu0
    %v1495 = vadd.f32 0.0, %v1494
    %v1496 = vpop.f32.mrf.mxu0
    %v1497 = vadd.f32 0.0, %v1496
    %1498 = vdwg.mxu0
    %v1499 = vadd.f32 %v1353, %v1424
    %v1500 = vadd.f32 %v1354, %v1426
    %v1501 = vadd.f32 %v1355, %v1495
    %v1502 = vadd.f32 %v1356, %v1497
    %v1503 = vxor.u32 %v1499, 2147483648
    %v1504 = vmul.f32 %v1503, 1.442695
    %v1505 = vpow.pop %v1504
    %v1506 = vadd.f32 %v1505, 1.0
    %v1507 = vrcp.pop %v1506
    %v1508 = vmul.f32 1.0, %v1507
    %v1509 = vxor.u32 %v1500, 2147483648
    %v1510 = vmul.f32 %v1509, 1.442695
    %v1511 = vpow.pop %v1510
    %v1512 = vadd.f32 %v1511, 1.0
    %v1513 = vrcp.pop %v1512
    %v1514 = vmul.f32 1.0, %v1513
    %v1515 = vtanh.pop %v1501
    %v1516 = vxor.u32 %v1502, 2147483648
    %v1517 = vmul.f32 %v1516, 1.442695
    %v1518 = vpow.pop %v1517
    %v1519 = vadd.f32 %v1518, 1.0
    %v1520 = vrcp.pop %v1519
    %v1521 = vmul.f32 1.0, %v1520
    %v1522 = vmul.f32 %v1514, %v1347
    %v1523 = vmul.f32 %v1508, %v1515
    %v1524 = vadd.f32 %v1522, %v1523
    %v1525 = vtanh.pop %v1524
    %v1526 = vmul.f32 %v1521, %v1525
    %s1527 = smul.u32 6, 4
    %s1528 = smul.addr %s1527, 8
    %s1529 = scalar_lea.vmem [#allocation2], %s1528
    %v1530 = vld [vmem:[%s1529] sm:$0xff]
    %v1531 = vld [vmem:[%s1529 + $0x8] sm:$0xff]
    %v1532 = vld [vmem:[%s1529 + $0x10] sm:$0xff]
    %v1533 = vld [vmem:[%s1529 + $0x18] sm:$0xff]
    %1534 = vmatprep.subr.mxu0 %v469
    %1535 = vmatpush1.msra.mxu0 %v468
    %1536 = vmatprep.subr.mxu0 %v465
    %1537 = vmatpush1.msra.mxu0 %v464
    %1538 = vmatprep.subr.mxu0 %v461
    %1539 = vmatpush1.msra.mxu0 %v460
    %1540 = vmatprep.subr.mxu0 %v457
    %1541 = vmatpush1.msra.mxu0 %v456
    %1542 = vmatprep.subr.mxu0 %v453
    %1543 = vmatpush1.msra.mxu0 %v452
    %1544 = vmatprep.subr.mxu0 %v449
    %1545 = vmatpush1.msra.mxu0 %v448
    %1546 = vmatprep.subr.mxu0 %v445
    %1547 = vmatpush1.msra.mxu0 %v444
    %1548 = vmatprep.subr.mxu0 %v441
    %1549 = vmatpush1.msra.mxu0 %v440
    %1550 = vmatprep.subr.mxu0 %v437
    %1551 = vmatpush1.msra.mxu0 %v436
    %1552 = vmatprep.subr.mxu0 %v433
    %1553 = vmatpush1.msra.mxu0 %v432
    %1554 = vmatprep.subr.mxu0 %v429
    %1555 = vmatpush1.msra.mxu0 %v428
    %1556 = vmatprep.subr.mxu0 %v425
    %1557 = vmatpush1.msra.mxu0 %v424
    %1558 = vmatprep.subr.mxu0 %v421
    %1559 = vmatpush1.msra.mxu0 %v420
    %1560 = vmatprep.subr.mxu0 %v417
    %1561 = vmatpush1.msra.mxu0 %v416
    %1562 = vmatprep.subr.mxu0 %v413
    %1563 = vmatpush1.msra.mxu0 %v412
    %1564 = vmatprep.subr.mxu0 %v409
    %1565 = vmatpush1.msra.mxu0 %v408
    %1566 = vmatprep.subr.mxu0 0.0
    %1567 = vmatpush2.msra.mxu0 0.0
    %1568 = vmatprep.subr.mxu0 0.0
    %1569 = vmatpush2.msra.mxu0 0.0
    %1570 = vmatprep.subr.mxu0 0.0
    %1571 = vmatpush2.msra.mxu0 0.0
    %1572 = vmatprep.subr.mxu0 0.0
    %1573 = vmatpush2.msra.mxu0 0.0
    %1574 = vmatprep.subr.mxu0 0.0
    %1575 = vmatpush2.msra.mxu0 0.0
    %1576 = vmatprep.subr.mxu0 0.0
    %1577 = vmatpush2.msra.mxu0 0.0
    %1578 = vmatprep.subr.mxu0 0.0
    %1579 = vmatpush2.msra.mxu0 0.0
    %1580 = vmatprep.subr.mxu0 0.0
    %1581 = vmatpush2.msra.mxu0 0.0
    %1582 = vmatprep.subr.mxu0 0.0
    %1583 = vmatpush2.msra.mxu0 0.0
    %1584 = vmatprep.subr.mxu0 0.0
    %1585 = vmatpush2.msra.mxu0 0.0
    %1586 = vmatprep.subr.mxu0 0.0
    %1587 = vmatpush2.msra.mxu0 0.0
    %1588 = vmatprep.subr.mxu0 0.0
    %1589 = vmatpush2.msra.mxu0 0.0
    %1590 = vmatprep.subr.mxu0 0.0
    %1591 = vmatpush2.msra.mxu0 0.0
    %1592 = vmatprep.subr.mxu0 0.0
    %1593 = vmatpush2.msra.mxu0 0.0
    %1594 = vmatprep.subr.mxu0 0.0
    %1595 = vmatpush2.msra.mxu0 0.0
    %1596 = vmatprep.subr.mxu0 0.0
    %1597 = vmatpush2.msra.mxu0 0.0
    %1598 = vmatprep.mubr.f32.mxu0 0.0
    %1599 = vmatmul.mubr.f32.gmra.mxu0 %v1526
    %v1600 = vpop.f32.mrf.mxu0
    %v1601 = vadd.f32 0.0, %v1600
    %v1602 = vpop.f32.mrf.mxu0
    %v1603 = vadd.f32 0.0, %v1602
    %1604 = vdwg.mxu0
    %1605 = vmatprep.subr.mxu0 %v471
    %1606 = vmatpush1.msra.mxu0 %v470
    %1607 = vmatprep.subr.mxu0 %v467
    %1608 = vmatpush1.msra.mxu0 %v466
    %1609 = vmatprep.subr.mxu0 %v463
    %1610 = vmatpush1.msra.mxu0 %v462
    %1611 = vmatprep.subr.mxu0 %v459
    %1612 = vmatpush1.msra.mxu0 %v458
    %1613 = vmatprep.subr.mxu0 %v455
    %1614 = vmatpush1.msra.mxu0 %v454
    %1615 = vmatprep.subr.mxu0 %v451
    %1616 = vmatpush1.msra.mxu0 %v450
    %1617 = vmatprep.subr.mxu0 %v447
    %1618 = vmatpush1.msra.mxu0 %v446
    %1619 = vmatprep.subr.mxu0 %v443
    %1620 = vmatpush1.msra.mxu0 %v442
    %1621 = vmatprep.subr.mxu0 %v439
    %1622 = vmatpush1.msra.mxu0 %v438
    %1623 = vmatprep.subr.mxu0 %v435
    %1624 = vmatpush1.msra.mxu0 %v434
    %1625 = vmatprep.subr.mxu0 %v431
    %1626 = vmatpush1.msra.mxu0 %v430
    %1627 = vmatprep.subr.mxu0 %v427
    %1628 = vmatpush1.msra.mxu0 %v426
    %1629 = vmatprep.subr.mxu0 %v423
    %1630 = vmatpush1.msra.mxu0 %v422
    %1631 = vmatprep.subr.mxu0 %v419
    %1632 = vmatpush1.msra.mxu0 %v418
    %1633 = vmatprep.subr.mxu0 %v415
    %1634 = vmatpush1.msra.mxu0 %v414
    %1635 = vmatprep.subr.mxu0 %v411
    %1636 = vmatpush1.msra.mxu0 %v410
    %1637 = vmatprep.subr.mxu0 0.0
    %1638 = vmatpush2.msra.mxu0 0.0
    %1639 = vmatprep.subr.mxu0 0.0
    %1640 = vmatpush2.msra.mxu0 0.0
    %1641 = vmatprep.subr.mxu0 0.0
    %1642 = vmatpush2.msra.mxu0 0.0
    %1643 = vmatprep.subr.mxu0 0.0
    %1644 = vmatpush2.msra.mxu0 0.0
    %1645 = vmatprep.subr.mxu0 0.0
    %1646 = vmatpush2.msra.mxu0 0.0
    %1647 = vmatprep.subr.mxu0 0.0
    %1648 = vmatpush2.msra.mxu0 0.0
    %1649 = vmatprep.subr.mxu0 0.0
    %1650 = vmatpush2.msra.mxu0 0.0
    %1651 = vmatprep.subr.mxu0 0.0
    %1652 = vmatpush2.msra.mxu0 0.0
    %1653 = vmatprep.subr.mxu0 0.0
    %1654 = vmatpush2.msra.mxu0 0.0
    %1655 = vmatprep.subr.mxu0 0.0
    %1656 = vmatpush2.msra.mxu0 0.0
    %1657 = vmatprep.subr.mxu0 0.0
    %1658 = vmatpush2.msra.mxu0 0.0
    %1659 = vmatprep.subr.mxu0 0.0
    %1660 = vmatpush2.msra.mxu0 0.0
    %1661 = vmatprep.subr.mxu0 0.0
    %1662 = vmatpush2.msra.mxu0 0.0
    %1663 = vmatprep.subr.mxu0 0.0
    %1664 = vmatpush2.msra.mxu0 0.0
    %1665 = vmatprep.subr.mxu0 0.0
    %1666 = vmatpush2.msra.mxu0 0.0
    %1667 = vmatprep.subr.mxu0 0.0
    %1668 = vmatpush2.msra.mxu0 0.0
    %1669 = vmatprep.mubr.f32.mxu0 0.0
    %1670 = vmatmul.mubr.f32.gmra.mxu0 %v1526
    %v1671 = vpop.f32.mrf.mxu0
    %v1672 = vadd.f32 0.0, %v1671
    %v1673 = vpop.f32.mrf.mxu0
    %v1674 = vadd.f32 0.0, %v1673
    %1675 = vdwg.mxu0
    %v1676 = vadd.f32 %v1530, %v1601
    %v1677 = vadd.f32 %v1531, %v1603
    %v1678 = vadd.f32 %v1532, %v1672
    %v1679 = vadd.f32 %v1533, %v1674
    %v1680 = vxor.u32 %v1676, 2147483648
    %v1681 = vmul.f32 %v1680, 1.442695
    %v1682 = vpow.pop %v1681
    %v1683 = vadd.f32 %v1682, 1.0
    %v1684 = vrcp.pop %v1683
    %v1685 = vmul.f32 1.0, %v1684
    %v1686 = vxor.u32 %v1677, 2147483648
    %v1687 = vmul.f32 %v1686, 1.442695
    %v1688 = vpow.pop %v1687
    %v1689 = vadd.f32 %v1688, 1.0
    %v1690 = vrcp.pop %v1689
    %v1691 = vmul.f32 1.0, %v1690
    %v1692 = vtanh.pop %v1678
    %v1693 = vxor.u32 %v1679, 2147483648
    %v1694 = vmul.f32 %v1693, 1.442695
    %v1695 = vpow.pop %v1694
    %v1696 = vadd.f32 %v1695, 1.0
    %v1697 = vrcp.pop %v1696
    %v1698 = vmul.f32 1.0, %v1697
    %v1699 = vmul.f32 %v1691, %v1524
    %v1700 = vmul.f32 %v1685, %v1692
    %v1701 = vadd.f32 %v1699, %v1700
    %v1702 = vtanh.pop %v1701
    %v1703 = vmul.f32 %v1698, %v1702
    %s1704 = smul.u32 7, 4
    %s1705 = smul.addr %s1704, 8
    %s1706 = scalar_lea.vmem [#allocation2], %s1705
    %v1707 = vld [vmem:[%s1706] sm:$0xff]
    %v1708 = vld [vmem:[%s1706 + $0x8] sm:$0xff]
    %v1709 = vld [vmem:[%s1706 + $0x10] sm:$0xff]
    %v1710 = vld [vmem:[%s1706 + $0x18] sm:$0xff]
    %1711 = vmatprep.subr.mxu0 %v469
    %1712 = vmatpush1.msra.mxu0 %v468
    %1713 = vmatprep.subr.mxu0 %v465
    %1714 = vmatpush1.msra.mxu0 %v464
    %1715 = vmatprep.subr.mxu0 %v461
    %1716 = vmatpush1.msra.mxu0 %v460
    %1717 = vmatprep.subr.mxu0 %v457
    %1718 = vmatpush1.msra.mxu0 %v456
    %1719 = vmatprep.subr.mxu0 %v453
    %1720 = vmatpush1.msra.mxu0 %v452
    %1721 = vmatprep.subr.mxu0 %v449
    %1722 = vmatpush1.msra.mxu0 %v448
    %1723 = vmatprep.subr.mxu0 %v445
    %1724 = vmatpush1.msra.mxu0 %v444
    %1725 = vmatprep.subr.mxu0 %v441
    %1726 = vmatpush1.msra.mxu0 %v440
    %1727 = vmatprep.subr.mxu0 %v437
    %1728 = vmatpush1.msra.mxu0 %v436
    %1729 = vmatprep.subr.mxu0 %v433
    %1730 = vmatpush1.msra.mxu0 %v432
    %1731 = vmatprep.subr.mxu0 %v429
    %1732 = vmatpush1.msra.mxu0 %v428
    %1733 = vmatprep.subr.mxu0 %v425
    %1734 = vmatpush1.msra.mxu0 %v424
    %1735 = vmatprep.subr.mxu0 %v421
    %1736 = vmatpush1.msra.mxu0 %v420
    %1737 = vmatprep.subr.mxu0 %v417
    %1738 = vmatpush1.msra.mxu0 %v416
    %1739 = vmatprep.subr.mxu0 %v413
    %1740 = vmatpush1.msra.mxu0 %v412
    %1741 = vmatprep.subr.mxu0 %v409
    %1742 = vmatpush1.msra.mxu0 %v408
    %1743 = vmatprep.subr.mxu0 0.0
    %1744 = vmatpush2.msra.mxu0 0.0
    %1745 = vmatprep.subr.mxu0 0.0
    %1746 = vmatpush2.msra.mxu0 0.0
    %1747 = vmatprep.subr.mxu0 0.0
    %1748 = vmatpush2.msra.mxu0 0.0
    %1749 = vmatprep.subr.mxu0 0.0
    %1750 = vmatpush2.msra.mxu0 0.0
    %1751 = vmatprep.subr.mxu0 0.0
    %1752 = vmatpush2.msra.mxu0 0.0
    %1753 = vmatprep.subr.mxu0 0.0
    %1754 = vmatpush2.msra.mxu0 0.0
    %1755 = vmatprep.subr.mxu0 0.0
    %1756 = vmatpush2.msra.mxu0 0.0
    %1757 = vmatprep.subr.mxu0 0.0
    %1758 = vmatpush2.msra.mxu0 0.0
    %1759 = vmatprep.subr.mxu0 0.0
    %1760 = vmatpush2.msra.mxu0 0.0
    %1761 = vmatprep.subr.mxu0 0.0
    %1762 = vmatpush2.msra.mxu0 0.0
    %1763 = vmatprep.subr.mxu0 0.0
    %1764 = vmatpush2.msra.mxu0 0.0
    %1765 = vmatprep.subr.mxu0 0.0
    %1766 = vmatpush2.msra.mxu0 0.0
    %1767 = vmatprep.subr.mxu0 0.0
    %1768 = vmatpush2.msra.mxu0 0.0
    %1769 = vmatprep.subr.mxu0 0.0
    %1770 = vmatpush2.msra.mxu0 0.0
    %1771 = vmatprep.subr.mxu0 0.0
    %1772 = vmatpush2.msra.mxu0 0.0
    %1773 = vmatprep.subr.mxu0 0.0
    %1774 = vmatpush2.msra.mxu0 0.0
    %1775 = vmatprep.mubr.f32.mxu0 0.0
    %1776 = vmatmul.mubr.f32.gmra.mxu0 %v1703
    %v1777 = vpop.f32.mrf.mxu0
    %v1778 = vadd.f32 0.0, %v1777
    %v1779 = vpop.f32.mrf.mxu0
    %v1780 = vadd.f32 0.0, %v1779
    %1781 = vdwg.mxu0
    %1782 = vmatprep.subr.mxu0 %v471
    %1783 = vmatpush1.msra.mxu0 %v470
    %1784 = vmatprep.subr.mxu0 %v467
    %1785 = vmatpush1.msra.mxu0 %v466
    %1786 = vmatprep.subr.mxu0 %v463
    %1787 = vmatpush1.msra.mxu0 %v462
    %1788 = vmatprep.subr.mxu0 %v459
    %1789 = vmatpush1.msra.mxu0 %v458
    %1790 = vmatprep.subr.mxu0 %v455
    %1791 = vmatpush1.msra.mxu0 %v454
    %1792 = vmatprep.subr.mxu0 %v451
    %1793 = vmatpush1.msra.mxu0 %v450
    %1794 = vmatprep.subr.mxu0 %v447
    %1795 = vmatpush1.msra.mxu0 %v446
    %1796 = vmatprep.subr.mxu0 %v443
    %1797 = vmatpush1.msra.mxu0 %v442
    %1798 = vmatprep.subr.mxu0 %v439
    %1799 = vmatpush1.msra.mxu0 %v438
    %1800 = vmatprep.subr.mxu0 %v435
    %1801 = vmatpush1.msra.mxu0 %v434
    %1802 = vmatprep.subr.mxu0 %v431
    %1803 = vmatpush1.msra.mxu0 %v430
    %1804 = vmatprep.subr.mxu0 %v427
    %1805 = vmatpush1.msra.mxu0 %v426
    %1806 = vmatprep.subr.mxu0 %v423
    %1807 = vmatpush1.msra.mxu0 %v422
    %1808 = vmatprep.subr.mxu0 %v419
    %1809 = vmatpush1.msra.mxu0 %v418
    %1810 = vmatprep.subr.mxu0 %v415
    %1811 = vmatpush1.msra.mxu0 %v414
    %1812 = vmatprep.subr.mxu0 %v411
    %1813 = vmatpush1.msra.mxu0 %v410
    %1814 = vmatprep.subr.mxu0 0.0
    %1815 = vmatpush2.msra.mxu0 0.0
    %1816 = vmatprep.subr.mxu0 0.0
    %1817 = vmatpush2.msra.mxu0 0.0
    %1818 = vmatprep.subr.mxu0 0.0
    %1819 = vmatpush2.msra.mxu0 0.0
    %1820 = vmatprep.subr.mxu0 0.0
    %1821 = vmatpush2.msra.mxu0 0.0
    %1822 = vmatprep.subr.mxu0 0.0
    %1823 = vmatpush2.msra.mxu0 0.0
    %1824 = vmatprep.subr.mxu0 0.0
    %1825 = vmatpush2.msra.mxu0 0.0
    %1826 = vmatprep.subr.mxu0 0.0
    %1827 = vmatpush2.msra.mxu0 0.0
    %1828 = vmatprep.subr.mxu0 0.0
    %1829 = vmatpush2.msra.mxu0 0.0
    %1830 = vmatprep.subr.mxu0 0.0
    %1831 = vmatpush2.msra.mxu0 0.0
    %1832 = vmatprep.subr.mxu0 0.0
    %1833 = vmatpush2.msra.mxu0 0.0
    %1834 = vmatprep.subr.mxu0 0.0
    %1835 = vmatpush2.msra.mxu0 0.0
    %1836 = vmatprep.subr.mxu0 0.0
    %1837 = vmatpush2.msra.mxu0 0.0
    %1838 = vmatprep.subr.mxu0 0.0
    %1839 = vmatpush2.msra.mxu0 0.0
    %1840 = vmatprep.subr.mxu0 0.0
    %1841 = vmatpush2.msra.mxu0 0.0
    %1842 = vmatprep.subr.mxu0 0.0
    %1843 = vmatpush2.msra.mxu0 0.0
    %1844 = vmatprep.subr.mxu0 0.0
    %1845 = vmatpush2.msra.mxu0 0.0
    %1846 = vmatprep.mubr.f32.mxu0 0.0
    %1847 = vmatmul.mubr.f32.gmra.mxu0 %v1703
    %v1848 = vpop.f32.mrf.mxu0
    %v1849 = vadd.f32 0.0, %v1848
    %v1850 = vpop.f32.mrf.mxu0
    %v1851 = vadd.f32 0.0, %v1850
    %1852 = vdwg.mxu0
    %v1853 = vadd.f32 %v1707, %v1778
    %v1854 = vadd.f32 %v1708, %v1780
    %v1855 = vadd.f32 %v1709, %v1849
    %v1856 = vadd.f32 %v1710, %v1851
    %v1857 = vxor.u32 %v1853, 2147483648
    %v1858 = vmul.f32 %v1857, 1.442695
    %v1859 = vpow.pop %v1858
    %v1860 = vadd.f32 %v1859, 1.0
    %v1861 = vrcp.pop %v1860
    %v1862 = vmul.f32 1.0, %v1861
    %v1863 = vxor.u32 %v1854, 2147483648
    %v1864 = vmul.f32 %v1863, 1.442695
    %v1865 = vpow.pop %v1864
    %v1866 = vadd.f32 %v1865, 1.0
    %v1867 = vrcp.pop %v1866
    %v1868 = vmul.f32 1.0, %v1867
    %v1869 = vtanh.pop %v1855
    %v1870 = vxor.u32 %v1856, 2147483648
    %v1871 = vmul.f32 %v1870, 1.442695
    %v1872 = vpow.pop %v1871
    %v1873 = vadd.f32 %v1872, 1.0
    %v1874 = vrcp.pop %v1873
    %v1875 = vmul.f32 1.0, %v1874
    %v1876 = vmul.f32 %v1868, %v1701
    %v1877 = vmul.f32 %v1862, %v1869
    %v1878 = vadd.f32 %v1876, %v1877
    %v1879 = vtanh.pop %v1878
    %v1880 = vmul.f32 %v1875, %v1879
    %v1881 = vld [vmem:[#allocation8] sm:$0xff]
    %v1882 = vld [vmem:[#allocation8 + $0x8] sm:$0xff]
    %v1883 = vld [vmem:[#allocation8 + $0x10] sm:$0xff]
    %v1884 = vld [vmem:[#allocation8 + $0x18] sm:$0xff]
    %v1885 = vld [vmem:[#allocation8 + $0x20] sm:$0xff]
    %v1886 = vld [vmem:[#allocation8 + $0x28] sm:$0xff]
    %v1887 = vld [vmem:[#allocation8 + $0x30] sm:$0xff]
    %v1888 = vld [vmem:[#allocation8 + $0x38] sm:$0xff]
    %v1889 = vld [vmem:[#allocation8 + $0x40] sm:$0xff]
    %v1890 = vld [vmem:[#allocation8 + $0x48] sm:$0xff]
    %v1891 = vld [vmem:[#allocation8 + $0x50] sm:$0xff]
    %v1892 = vld [vmem:[#allocation8 + $0x58] sm:$0xff]
    %v1893 = vld [vmem:[#allocation8 + $0x60] sm:$0xff]
    %v1894 = vld [vmem:[#allocation8 + $0x68] sm:$0xff]
    %v1895 = vld [vmem:[#allocation8 + $0x70] sm:$0xff]
    %v1896 = vld [vmem:[#allocation8 + $0x78] sm:$0xff]
    %v1897 = vld [vmem:[%s5] sm:$0x1]
    %v1899 = vlaneseq
    %v1900 = vshrl.u32 %v1899, 7
    %v1901 = vsub.s32 0, %v1900
    %v1902 = vrot.slane %v1897, %v1901
    %1904 = vmatprep.subr.mxu0 0.0
    %1905 = vmatpush1.msra.mxu0 %v1896
    %1906 = vmatprep.subr.mxu0 0.0
    %1907 = vmatpush1.msra.mxu0 %v1895
    %1908 = vmatprep.subr.mxu0 0.0
    %1909 = vmatpush1.msra.mxu0 %v1894
    %1910 = vmatprep.subr.mxu0 0.0
    %1911 = vmatpush1.msra.mxu0 %v1893
    %1912 = vmatprep.subr.mxu0 0.0
    %1913 = vmatpush1.msra.mxu0 %v1892
    %1914 = vmatprep.subr.mxu0 0.0
    %1915 = vmatpush1.msra.mxu0 %v1891
    %1916 = vmatprep.subr.mxu0 0.0
    %1917 = vmatpush1.msra.mxu0 %v1890
    %1918 = vmatprep.subr.mxu0 0.0
    %1919 = vmatpush1.msra.mxu0 %v1889
    %1920 = vmatprep.subr.mxu0 0.0
    %1921 = vmatpush1.msra.mxu0 %v1888
    %1922 = vmatprep.subr.mxu0 0.0
    %1923 = vmatpush1.msra.mxu0 %v1887
    %1924 = vmatprep.subr.mxu0 0.0
    %1925 = vmatpush1.msra.mxu0 %v1886
    %1926 = vmatprep.subr.mxu0 0.0
    %1927 = vmatpush1.msra.mxu0 %v1885
    %1928 = vmatprep.subr.mxu0 0.0
    %1929 = vmatpush1.msra.mxu0 %v1884
    %1930 = vmatprep.subr.mxu0 0.0
    %1931 = vmatpush1.msra.mxu0 %v1883
    %1932 = vmatprep.subr.mxu0 0.0
    %1933 = vmatpush1.msra.mxu0 %v1882
    %1934 = vmatprep.subr.mxu0 0.0
    %1935 = vmatpush1.msra.mxu0 %v1881
    %1936 = vmatprep.subr.mxu0 0.0
    %1937 = vmatpush2.msra.mxu0 0.0
    %1938 = vmatprep.subr.mxu0 0.0
    %1939 = vmatpush2.msra.mxu0 0.0
    %1940 = vmatprep.subr.mxu0 0.0
    %1941 = vmatpush2.msra.mxu0 0.0
    %1942 = vmatprep.subr.mxu0 0.0
    %1943 = vmatpush2.msra.mxu0 0.0
    %1944 = vmatprep.subr.mxu0 0.0
    %1945 = vmatpush2.msra.mxu0 0.0
    %1946 = vmatprep.subr.mxu0 0.0
    %1947 = vmatpush2.msra.mxu0 0.0
    %1948 = vmatprep.subr.mxu0 0.0
    %1949 = vmatpush2.msra.mxu0 0.0
    %1950 = vmatprep.subr.mxu0 0.0
    %1951 = vmatpush2.msra.mxu0 0.0
    %1952 = vmatprep.subr.mxu0 0.0
    %1953 = vmatpush2.msra.mxu0 0.0
    %1954 = vmatprep.subr.mxu0 0.0
    %1955 = vmatpush2.msra.mxu0 0.0
    %1956 = vmatprep.subr.mxu0 0.0
    %1957 = vmatpush2.msra.mxu0 0.0
    %1958 = vmatprep.subr.mxu0 0.0
    %1959 = vmatpush2.msra.mxu0 0.0
    %1960 = vmatprep.subr.mxu0 0.0
    %1961 = vmatpush2.msra.mxu0 0.0
    %1962 = vmatprep.subr.mxu0 0.0
    %1963 = vmatpush2.msra.mxu0 0.0
    %1964 = vmatprep.subr.mxu0 0.0
    %1965 = vmatpush2.msra.mxu0 0.0
    %1966 = vmatprep.subr.mxu0 0.0
    %1967 = vmatpush2.msra.mxu0 0.0
    %1968 = vmatprep.mubr.f32.mxu0 0.0
    %1969 = vmatmul.mubr.f32.gmra.mxu0 %v1880
    %v1970 = vpop.f32.mrf.mxu0
    %v1971 = vadd.f32 %v1902, %v1970
    %v1972 = vpop.f32.mrf.mxu0
    %1973 = vdwg.mxu0
    %v1974 = vmax.f32 %v1971, 0.0
    %v1975 = vld [vmem:[%s6] sm:$0x1]
    %v1977 = vlaneseq
    %v1978 = vshrl.u32 %v1977, 7
    %v1979 = vsub.s32 0, %v1978
    %v1980 = vrot.slane %v1975, %v1979
    %v1982 = vmul.f32 %v1974, %v1980
    %1983 = vadd.xlane.f32.xlu0 %v1982
    %v1984 = vpop.xlane.xlu0 %1983
    %v1985 = vld [vmem:[#allocation3] sm:$0x1]
    %v1987 = vlaneseq
    %v1988 = vshrl.u32 %v1987, 7
    %v1989 = vsub.s32 0, %v1988
    %v1990 = vrot.slane %v1985, %v1989
    %v1992 = vadd.f32 %v1984, %v1990
    %v1993 = vxor.u32 %v1992, 2147483648
    %v1994 = vmul.f32 %v1993, 1.442695
    %v1995 = vpow.pop %v1994
    %v1996 = vadd.f32 %v1995, 1.0
    %v1997 = vrcp.pop %v1996
    %v1998 = vmul.f32 1.0, %v1997
    %vm1999 = vcmask 7168
    %2000 = vst.msk [vmem:[%s8] sm:$0xff] %vm1999, %v1998
    // Predicated region
    $region46: #{tpu_custom_call.1} parent=1 // pred_check
      _
    $region47: #{tpu_custom_call.1} parent=1 // pred_check_branch
      %2002 = sbr.rel (0) target = $region49
    $region48: #{tpu_custom_call.1} parent=1 // pred_region
      _
    $region49: #{tpu_custom_call.1} parent=1 // pred_fallthru
      _
    // Predicated region
    $region50: #{tpu_custom_call.1} parent=1 // pred_check
      _
    $region51: #{tpu_custom_call.1} parent=1 // pred_check_branch
      %2004 = sbr.rel (0) target = $region53
    $region52: #{tpu_custom_call.1} parent=1 // pred_region
      _
    $region53: #{tpu_custom_call.1} parent=1 // pred_fallthru
      _
    %2005 = vsyncpa [#allocation5], 1
    %2006 = vsyncpa [#allocation7], 1

</llo_original>
